<compile_context>
chip_gen: v5e
topology: v5e:2x2
jax: 0.10.0
libtpu: 0.0.40
codegen_flags: <defaults>
</compile_context>

<pallas_src>
import math
from functools import partial

import jax
import jax.numpy as jnp
from jax.experimental import pallas as pl
from jax.experimental.pallas import tpu as pltpu


# f32 keeps exact parity with the f32 PyTorch reference.  Set to jnp.bfloat16 on
# v5e/v6e for MXU throughput (accumulation stays f32); relax tolerances accordingly.
MATMUL_DTYPE = jnp.float32


# ----------------------------- config -------------------------------------- #
class GemmaConfig:
    def __init__(self):
        self.vocab_size = 128
        self.hidden_size = 64
        self.intermediate_size = 128
        self.num_hidden_layers = 2
        self.num_attention_heads = 4
        self.num_key_value_heads = 2
        self.head_dim = 16
        self.rms_norm_eps = 1e-6
        self.rope_theta = 10000.0
        self.attention_dropout = 0.0     # eval mode -> dropout is a no-op
        self.attention_bias = False
        self.pad_token_id = 0


# ----------------------------- shared math ---------------------------------- #
def _gelu_tanh(x):
    # approximate="tanh" GELU, as used by GemmaMLP
    return 0.5 * x * (1.0 + jnp.tanh(0.7978845608028654 * (x + 0.044715 * x * x * x)))


def _rms_norm(x, w, eps):
    # Gemma RMSNorm: x * rsqrt(mean(x^2) + eps) * (1 + weight)
    var = jnp.mean(x * x, axis=-1, keepdims=True)
    return x * jax.lax.rsqrt(var + eps) * (1.0 + w)


def _mm(a, b):
    # MXU matmul; operands optionally cast to bf16, accumulation in f32.
    return jnp.dot(a.astype(MATMUL_DTYPE), b.astype(MATMUL_DTYPE),
                   preferred_element_type=jnp.float32)


# ----------------------------- fused Pallas kernel --------------------------- #
def gemma_fused_kernel(
    # per-sequence resident inputs (constant across the layer grid axis)
    h0_ref, mask_ref, cos_ref, sin_ref,
    # per-layer streamed weights
    ln1_ref, wqkv_ref, wo_ref, ln2_ref, wgu_ref, wd_ref,
    # shared (constant) weights
    fnorm_ref, wlm_ref,
    # outputs
    hid_ref, logits_ref,
    # scratch
    h_acc,
    *, batch, seq, num_heads, num_kv_heads, head_dim,
    intermediate_size, eps, hidden_size,
):
    l = pl.program_id(0)

    B, S = batch, seq
    M, H = h_acc.shape                      # M = B * S
    groups = num_heads // num_kv_heads
    dq = num_heads * head_dim
    dk = num_kv_heads * head_dim
    inter = intermediate_size
    inv_sqrt_hd = 1.0 / math.sqrt(head_dim)

    # First layer step: hidden_states = inputs_embeds * sqrt(hidden_size)
    @pl.when(l == 0)
    def _():
        h_acc[...] = h0_ref[...] * (float(hidden_size) ** 0.5)

    h = h_acc[...]                          # (M, H) activations resident in VMEM
    cos = cos_ref[...]                      # (M, dq)  per-head tiled cos table
    sin = sin_ref[...]                      # (M, dq)
    mask = mask_ref[...]                    # (B, S, S) additive mask

    # --------------------------- attention block --------------------------- #
    x = _rms_norm(h, ln1_ref[...], eps)

    # Fused lane-dense QKV projection.  Column layout (rotate_half folded into the
    # weights host-side):  [ q | rotate_half(q) | k | rotate_half(k) | v ]
    qkv = _mm(x, wqkv_ref[...])             # (M, 2*dq + 3*dk)
    q = qkv[:, :dq]
    rq = qkv[:, dq:2 * dq]
    k = qkv[:, 2 * dq:2 * dq + dk]
    rk = qkv[:, 2 * dq + dk:2 * dq + 2 * dk]
    v = qkv[:, 2 * dq + 2 * dk:]

    # RoPE, vectorized across all heads as pure elementwise math on 2-D slabs.
    q_rot = q * cos + rq * sin              # (M, dq)
    k_rot = k * cos[:, :dk] + rk * sin[:, :dk]   # (M, dk)  (tables repeat per head)

    # Per-head attention (nH=4 -> static loop is fine); each head uses a single
    # full-head_dim einsum; GQA maps head hh -> kv head hh // groups.
    head_ctx = []
    for hh in range(num_heads):
        c = hh // groups
        qh = q_rot[:, hh * head_dim:(hh + 1) * head_dim].reshape(B, S, head_dim)
        kh = k_rot[:, c * head_dim:(c + 1) * head_dim].reshape(B, S, head_dim)
        vh = v[:, c * head_dim:(c + 1) * head_dim].reshape(B, S, head_dim)

        s = jnp.einsum('bqd,bkd->bqk', qh, kh,
                       preferred_element_type=jnp.float32) * inv_sqrt_hd
        s = s + mask                                       # (B, S, S)
        m = jnp.max(s, axis=-1, keepdims=True)
        p = jnp.exp(s - m)
        p = p * pl.reciprocal(jnp.sum(p, axis=-1, keepdims=True), approx=True)

        o = jnp.einsum('bqk,bkd->bqd', p.astype(MATMUL_DTYPE),
                       vh.astype(MATMUL_DTYPE),
                       preferred_element_type=jnp.float32)  # (B, S, hd)
        head_ctx.append(o.reshape(M, head_dim))

    ctx = jnp.concatenate(head_ctx, axis=-1)                # (M, dq) lane-dense
    h = h + _mm(ctx, wo_ref[...])                           # single concat-heads o_proj

    # ------------------------------ MLP block ------------------------------ #
    x2 = _rms_norm(h, ln2_ref[...], eps)
    gu = _mm(x2, wgu_ref[...])                              # (M, 2*I) fused gate|up
    act = _gelu_tanh(gu[:, :inter]) * gu[:, inter:]
    h = h + _mm(act, wd_ref[...])

    h_acc[...] = h

    # ----------------- final norm + lm_head (last layer only) -------------- #
    @pl.when(l == pl.num_programs(0) - 1)
    def _():
        hf = _rms_norm(h, fnorm_ref[...], eps)
        hid_ref[...] = hf.astype(hid_ref.dtype)
        logits_ref[...] = _mm(hf, wlm_ref[...]).astype(logits_ref.dtype)


# ----------------------------- host-side glue -------------------------------- #
def init_params(cfg, key):
    H, I, V = cfg.hidden_size, cfg.intermediate_size, cfg.vocab_size
    nH, nKV, hd = cfg.num_attention_heads, cfg.num_key_value_heads, cfg.head_dim

    def w(k, shape, scale=0.05):
        return scale * jax.random.normal(k, shape, jnp.float32)

    layers = []
    for layer in range(cfg.num_hidden_layers):
        ks = jax.random.split(jax.random.fold_in(key, layer), 9)
        layers.append(dict(
            ln1=w(ks[0], (H,), 0.1),
            q=w(ks[1], (H, nH * hd)),
            k=w(ks[2], (H, nKV * hd)),
            v=w(ks[3], (H, nKV * hd)),
            o=w(ks[4], (nH * hd, H)),
            ln2=w(ks[5], (H,), 0.1),
            gate=w(ks[6], (H, I)),
            up=w(ks[7], (H, I)),
            down=w(ks[8], (I, H)),
        ))
    norm = w(jax.random.fold_in(key, 12345), (H,), 0.1)
    lm_head = w(jax.random.fold_in(key, 54321), (H, V))
    return dict(layers=layers, norm=norm, lm_head=lm_head)


def rotate_half_matrix(n_heads, head_dim):
    """Block-diagonal signed permutation P with x @ P == rotate_half(x) per head."""
    half = head_dim // 2
    blk = jnp.zeros((head_dim, head_dim), jnp.float32)
    blk = blk.at[:half, half:].set(jnp.eye(half, dtype=jnp.float32))
    blk = blk.at[half:, :half].set(-jnp.eye(half, dtype=jnp.float32))
    return jnp.kron(jnp.eye(n_heads, dtype=jnp.float32), blk)


def pack_params(params, cfg):
    """Stack per-layer weights along a leading layer axis.

    QKV is fused (with the rotate_half permutation folded into extra columns) so the
    kernel's RoPE is pure elementwise math; gate|up is fused lane-dense."""
    H = cfg.hidden_size
    nH, nKV, hd = cfg.num_attention_heads, cfg.num_key_value_heads, cfg.head_dim
    Pq = rotate_half_matrix(nH, hd)
    Pk = rotate_half_matrix(nKV, hd)
    layers = params['layers']

    def fuse_qkv(lp):
        return jnp.concatenate(
            [lp['q'], lp['q'] @ Pq, lp['k'], lp['k'] @ Pk, lp['v']], axis=1)

    cast = lambda a: a.astype(MATMUL_DTYPE)
    return dict(
        ln1=jnp.stack([lp['ln1'].reshape(1, H) for lp in layers]),          # (L,1,H)
        wqkv=jnp.stack([cast(fuse_qkv(lp)) for lp in layers]),              # (L,H,2dq+3dk)
        wo=jnp.stack([cast(lp['o']) for lp in layers]),                     # (L,dq,H)
        ln2=jnp.stack([lp['ln2'].reshape(1, H) for lp in layers]),          # (L,1,H)
        wgu=jnp.stack([cast(jnp.concatenate([lp['gate'], lp['up']], axis=1))
                       for lp in layers]),                                  # (L,H,2I)
        wd=jnp.stack([cast(lp['down']) for lp in layers]),                  # (L,I,H)
        fnorm=params['norm'].reshape(1, H),
        wlm=cast(params['lm_head']),
    )


def rotary_half_tables(position_ids, head_dim, base):
    inv_freq = 1.0 / (base ** (jnp.arange(0, head_dim, 2, dtype=jnp.float32) / head_dim))
    freqs = position_ids.astype(jnp.float32)[..., None] * inv_freq[None, None, :]
    return jnp.cos(freqs), jnp.sin(freqs)        # each (B, S, head_dim // 2)


def gemma_forward(params, inputs_embeds, attention_mask, position_ids, cfg):
    B, S, H = inputs_embeds.shape
    nH, nKV, hd = cfg.num_attention_heads, cfg.num_key_value_heads, cfg.head_dim
    I, V, L = cfg.intermediate_size, cfg.vocab_size, cfg.num_hidden_layers
    dq, dk = nH * hd, nKV * hd
    dfuse = 2 * dq + 3 * dk
    M = B * S

    # Full-width, per-head tiled RoPE tables (lane-dense, layout plumbing on host).
    cos_h, sin_h = rotary_half_tables(position_ids, hd, cfg.rope_theta)   # (B,S,hd/2)
    cos_full = jnp.concatenate([cos_h, cos_h], axis=-1)                   # (B,S,hd)
    sin_full = jnp.concatenate([sin_h, sin_h], axis=-1)
    cos_t = jnp.tile(cos_full, (1, 1, nH)).reshape(M, dq)
    sin_t = jnp.tile(sin_full, (1, 1, nH)).reshape(M, dq)

    mask3 = attention_mask[:, 0]                                          # (B,S,S)
    h0 = inputs_embeds.reshape(M, H)
    packed = pack_params(params, cfg)

    seq_map2 = lambda l: (0, 0)
    seq_map3 = lambda l: (0, 0, 0)
    layer_map3 = lambda l: (l, 0, 0)

    kernel = partial(
        gemma_fused_kernel,
        batch=B, seq=S, num_heads=nH, num_kv_heads=nKV, head_dim=hd,
        intermediate_size=I, eps=cfg.rms_norm_eps, hidden_size=H,
    )

    hid2d, logits2d = pl.pallas_call(
        kernel,
        out_shape=(jax.ShapeDtypeStruct((M, H), jnp.float32),
                   jax.ShapeDtypeStruct((M, V), jnp.float32)),
        grid_spec=pltpu.PrefetchScalarGridSpec(
            num_scalar_prefetch=0,
            grid=(L,),
            in_specs=[
                pl.BlockSpec((M, H), seq_map2),            # inputs_embeds (B*S, H)
                pl.BlockSpec((B, S, S), seq_map3),         # additive attention mask
                pl.BlockSpec((M, dq), seq_map2),           # tiled RoPE cos
                pl.BlockSpec((M, dq), seq_map2),           # tiled RoPE sin
                pl.BlockSpec((None, 1, H), layer_map3),    # input_layernorm
                pl.BlockSpec((None, H, dfuse), layer_map3),# fused Wq|WqP|Wk|WkP|Wv
                pl.BlockSpec((None, dq, H), layer_map3),   # Wo (concat-heads)
                pl.BlockSpec((None, 1, H), layer_map3),    # post_attention_layernorm
                pl.BlockSpec((None, H, 2 * I), layer_map3),# fused Wgate|Wup
                pl.BlockSpec((None, I, H), layer_map3),    # Wdown
                pl.BlockSpec((1, H), seq_map2),            # final norm weight
                pl.BlockSpec((H, V), seq_map2),            # lm_head weight
            ],
            out_specs=[
                pl.BlockSpec((M, H), seq_map2),            # final hidden states
                pl.BlockSpec((M, V), seq_map2),            # logits (128 lanes)
            ],
            scratch_shapes=[
                pltpu.VMEM((M, H), jnp.float32),           # resident activations
            ],
        ),
        compiler_params=pltpu.CompilerParams(
            dimension_semantics=("arbitrary",)),
    )(h0, mask3, cos_t, sin_t,
      packed['ln1'], packed['wqkv'], packed['wo'], packed['ln2'],
      packed['wgu'], packed['wd'], packed['fnorm'], packed['wlm'])

    return hid2d.reshape(B, S, H), logits2d.reshape(B, S, V)


# ----------------------------- pure-JAX reference --------------------------- #
def _ref_apply_rope(x, cos, sin):               # x: (B, nH, S, hd); cos/sin: (B, S, hd)
    c, s = cos[:, None], sin[:, None]
    half = x.shape[-1] // 2
    x1, x2 = x[..., :half], x[..., half:]
    rot = jnp.concatenate([-x2, x1], axis=-1)
    return x * c + rot * s


def reference_forward(params, inputs_embeds, attention_mask, position_ids, cfg):
    B, S, H = inputs_embeds.shape
    nH, nKV, hd = cfg.num_attention_heads, cfg.num_key_value_heads, cfg.head_dim
    groups = nH // nKV
    eps = cfg.rms_norm_eps

    cos_h, sin_h = rotary_half_tables(position_ids, hd, cfg.rope_theta)
    cos = jnp.concatenate([cos_h, cos_h], axis=-1)
    sin = jnp.concatenate([sin_h, sin_h], axis=-1)

    h = inputs_embeds * (float(H) ** 0.5)
    for lp in params['layers']:
        res = h
        x = _rms_norm(h, lp['ln1'], eps)
        q = (x @ lp['q']).reshape(B, S, nH, hd).transpose(0, 2, 1, 3)
        k = (x @ lp['k']).reshape(B, S, nKV, hd).transpose(0, 2, 1, 3)
        v = (x @ lp['v']).reshape(B, S, nKV, hd).transpose(0, 2, 1, 3)
        q = _ref_apply_rope(q, cos, sin)
        k = _ref_apply_rope(k, cos, sin)
        k = jnp.repeat(k, groups, axis=1)
        v = jnp.repeat(v, groups, axis=1)
        scores = jnp.einsum('bhqd,bhkd->bhqk', q, k) / math.sqrt(hd) + attention_mask
        p = jax.nn.softmax(scores, axis=-1)
        ao = jnp.einsum('bhqk,bhkd->bhqd', p, v).transpose(0, 2, 1, 3).reshape(B, S, -1)
        h = res + ao @ lp['o']

        res = h
        x = _rms_norm(h, lp['ln2'], eps)
        h = res + (_gelu_tanh(x @ lp['gate']) * (x @ lp['up'])) @ lp['down']

    hidden = _rms_norm(h, params['norm'], eps)
    logits = hidden @ params['lm_head']
    return hidden, logits


# ----------------------------- main ----------------------------------------- #
if __name__ == "__main__":
    cfg = GemmaConfig()
    B, S, H = 2, 8, cfg.hidden_size

    key = jax.random.PRNGKey(0)
    k_emb, k_par = jax.random.split(key)

    inputs_embeds = jax.random.normal(k_emb, (B, S, H), jnp.float32)
    position_ids = jnp.broadcast_to(jnp.arange(S, dtype=jnp.int32)[None, :], (B, S))

    # causal additive mask (B, 1, S, S): 0 where allowed, -1e9 where masked
    row = jnp.arange(S)[:, None]
    col = jnp.arange(S)[None, :]
    causal = jnp.where(col <= row, 0.0, -1e9).astype(jnp.float32)
    attention_mask = jnp.broadcast_to(causal[None, None, :, :], (B, 1, S, S))

    params = init_params(cfg, k_par)

    # TODO(synk): kv_cache (incremental decoding cache) is not modeled; this is the
    # kv_cache=None / full-sequence path of GemmaForCausalLM.forward.

    hidden, logits = gemma_forward(params, inputs_embeds, attention_mask, position_ids, cfg)
    hidden = jax.block_until_ready(hidden)
    logits = jax.block_until_ready(logits)

    ref_hidden, ref_logits = reference_forward(params, inputs_embeds, attention_mask,
                                               position_ids, cfg)
    ref_hidden = jax.block_until_ready(ref_hidden)
    ref_logits = jax.block_until_ready(ref_logits)

    assert hidden.shape == (B, S, H) and hidden.dtype == jnp.float32
    assert logits.shape == (B, S, cfg.vocab_size) and logits.dtype == jnp.float32
    err_h = float(jnp.max(jnp.abs(hidden - ref_hidden)))
    err_l = float(jnp.max(jnp.abs(logits - ref_logits)))
    # Tolerance allows for the EUP approximate reciprocal in the softmax denominator.
    assert jnp.allclose(hidden, ref_hidden, atol=3e-3, rtol=3e-3), f"hidden max err {err_h}"
    assert jnp.allclose(logits, ref_logits, atol=3e-3, rtol=3e-3), f"logits max err {err_l}"

    print("KERNEL_OK")
</pallas_src>

<mosaic_0001>
module attributes {stable_mosaic.version = 11 : i64} {
  func.func @gemma_fused_kernel(%arg0: i32, %arg1: memref<16x64xf32, #tpu.memory_space<vmem>>, %arg2: memref<2x8x8xf32, #tpu.memory_space<vmem>>, %arg3: memref<16x64xf32, #tpu.memory_space<vmem>>, %arg4: memref<16x64xf32, #tpu.memory_space<vmem>>, %arg5: memref<1x1x64xf32, #tpu.memory_space<vmem>>, %arg6: memref<1x64x224xf32, #tpu.memory_space<vmem>>, %arg7: memref<1x64x64xf32, #tpu.memory_space<vmem>>, %arg8: memref<1x1x64xf32, #tpu.memory_space<vmem>>, %arg9: memref<1x64x256xf32, #tpu.memory_space<vmem>>, %arg10: memref<1x128x64xf32, #tpu.memory_space<vmem>>, %arg11: memref<1x64xf32, #tpu.memory_space<vmem>>, %arg12: memref<64x128xf32, #tpu.memory_space<vmem>>, %arg13: memref<16x64xf32, #tpu.memory_space<vmem>>, %arg14: memref<16x128xf32, #tpu.memory_space<vmem>>, %arg15: memref<16x64xf32, #tpu.memory_space<vmem>>) attributes {dimension_semantics = [#tpu.dimension_semantics<arbitrary>], iteration_bounds = array<i64: 2>, scalar_prefetch = 0 : i64, scratch_operands = 1 : i64, tpu.core_type = #tpu.core_type<tc>, window_params = [{pipeline_mode = #tpu.pipeline_mode<synchronous>, transform_indices = @transform_0, window_bounds = array<i64: 16, 64>}, {pipeline_mode = #tpu.pipeline_mode<synchronous>, transform_indices = @transform_1, window_bounds = array<i64: 2, 8, 8>}, {pipeline_mode = #tpu.pipeline_mode<synchronous>, transform_indices = @transform_2, window_bounds = array<i64: 16, 64>}, {pipeline_mode = #tpu.pipeline_mode<synchronous>, transform_indices = @transform_3, window_bounds = array<i64: 16, 64>}, {transform_indices = @transform_4, window_bounds = array<i64: 1, 1, 64>}, {transform_indices = @transform_5, window_bounds = array<i64: 1, 64, 224>}, {transform_indices = @transform_6, window_bounds = array<i64: 1, 64, 64>}, {transform_indices = @transform_7, window_bounds = array<i64: 1, 1, 64>}, {transform_indices = @transform_8, window_bounds = array<i64: 1, 64, 256>}, {transform_indices = @transform_9, window_bounds = array<i64: 1, 128, 64>}, {pipeline_mode = #tpu.pipeline_mode<synchronous>, transform_indices = @transform_10, window_bounds = array<i64: 1, 64>}, {pipeline_mode = #tpu.pipeline_mode<synchronous>, transform_indices = @transform_11, window_bounds = array<i64: 64, 128>}, {pipeline_mode = #tpu.pipeline_mode<synchronous>, transform_indices = @transform_12, window_bounds = array<i64: 16, 64>}, {pipeline_mode = #tpu.pipeline_mode<synchronous>, transform_indices = @transform_13, window_bounds = array<i64: 16, 128>}]} {
    %c0_i32 = arith.constant 0 : i32
    %0 = arith.cmpi eq, %arg0, %c0_i32 : i32
    %1 = arith.extui %0 : i1 to i32
    %c0_i32_0 = arith.constant 0 : i32
    %2 = arith.cmpi ne, %1, %c0_i32_0 : i32
    scf.if %2 {
      %c0_65 = arith.constant 0 : index
      %c0_66 = arith.constant 0 : index
      %175 = vector.load %arg1[%c0_65, %c0_66] : memref<16x64xf32, #tpu.memory_space<vmem>>, vector<16x64xf32>
      %cst_67 = arith.constant 8.000000e+00 : f32
      %176 = vector.broadcast %cst_67 : f32 to vector<16x64xf32>
      %177 = arith.mulf %175, %176 : vector<16x64xf32>
      %c0_68 = arith.constant 0 : index
      %c0_69 = arith.constant 0 : index
      %178 = vector.load %arg15[%c0_68, %c0_69] : memref<16x64xf32, #tpu.memory_space<vmem>>, vector<16x64xf32>
      tpu.vector_store %arg15[%c0_68, %c0_69], %177 {strides = array<i32>} : memref<16x64xf32, #tpu.memory_space<vmem>>, vector<16x64xf32>,
    } else {
    }
    %c0 = arith.constant 0 : index
    %c0_1 = arith.constant 0 : index
    %3 = vector.load %arg15[%c0, %c0_1] : memref<16x64xf32, #tpu.memory_space<vmem>>, vector<16x64xf32>
    %c0_2 = arith.constant 0 : index
    %c0_3 = arith.constant 0 : index
    %4 = vector.load %arg3[%c0_2, %c0_3] : memref<16x64xf32, #tpu.memory_space<vmem>>, vector<16x64xf32>
    %c0_4 = arith.constant 0 : index
    %c0_5 = arith.constant 0 : index
    %5 = vector.load %arg4[%c0_4, %c0_5] : memref<16x64xf32, #tpu.memory_space<vmem>>, vector<16x64xf32>
    %c0_6 = arith.constant 0 : index
    %c0_7 = arith.constant 0 : index
    %c0_8 = arith.constant 0 : index
    %6 = vector.load %arg2[%c0_6, %c0_7, %c0_8] : memref<2x8x8xf32, #tpu.memory_space<vmem>>, vector<2x8x8xf32>
    %c0_9 = arith.constant 0 : index
    %c0_10 = arith.constant 0 : index
    %c0_11 = arith.constant 0 : index
    %7 = vector.load %arg5[%c0_9, %c0_10, %c0_11] : memref<1x1x64xf32, #tpu.memory_space<vmem>>, vector<1x1x64xf32>
    %8 = vector.shape_cast %7 : vector<1x1x64xf32> to vector<1x64xf32>
    %9 = arith.mulf %3, %3 : vector<16x64xf32>
    %cst = arith.constant dense<0.000000e+00> : vector<16xf32>
    %10 = vector.multi_reduction <add>, %9, %cst [1] : vector<16x64xf32> to vector<16xf32>
    %11 = vector.shape_cast %10 : vector<16xf32> to vector<16x1xf32>
    %cst_12 = arith.constant 6.400000e+01 : f32
    %12 = vector.broadcast %cst_12 : f32 to vector<16x1xf32>
    %13 = arith.divf %11, %12 : vector<16x1xf32>
    %cst_13 = arith.constant 9.99999997E-7 : f32
    %14 = vector.broadcast %cst_13 : f32 to vector<16x1xf32>
    %15 = arith.addf %13, %14 : vector<16x1xf32>
    %16 = math.rsqrt %15 : vector<16x1xf32>
    %17 = vector.broadcast %16 : vector<16x1xf32> to vector<16x64xf32>
    %18 = arith.mulf %3, %17 : vector<16x64xf32>
    %cst_14 = arith.constant 1.000000e+00 : f32
    %19 = vector.broadcast %cst_14 : f32 to vector<1x64xf32>
    %20 = arith.addf %19, %8 : vector<1x64xf32>
    %21 = vector.broadcast %20 : vector<1x64xf32> to vector<16x64xf32>
    %22 = arith.mulf %18, %21 : vector<16x64xf32>
    %c0_15 = arith.constant 0 : index
    %c0_16 = arith.constant 0 : index
    %c0_17 = arith.constant 0 : index
    %23 = vector.load %arg6[%c0_15, %c0_16, %c0_17] : memref<1x64x224xf32, #tpu.memory_space<vmem>>, vector<1x64x224xf32>
    %24 = vector.shape_cast %23 : vector<1x64x224xf32> to vector<64x224xf32>
    %cst_18 = arith.constant dense<0.000000e+00> : vector<16x224xf32>
    %25 = tpu.matmul %22, %24, %cst_18 {dimension_numbers = #tpu.dot_dimension_numbers<[1], [0], [0], [1], [0, 0, 1, 1], [], []>} : vector<16x64xf32>, vector<64x224xf32>, vector<16x224xf32> -> vector<16x224xf32>
    %26 = vector.extract_strided_slice %25 {offsets = [0, 0], sizes = [16, 64], strides = [1, 1]} : vector<16x224xf32> to vector<16x64xf32>
    %27 = vector.extract_strided_slice %25 {offsets = [0, 64], sizes = [16, 64], strides = [1, 1]} : vector<16x224xf32> to vector<16x64xf32>
    %28 = vector.extract_strided_slice %25 {offsets = [0, 128], sizes = [16, 32], strides = [1, 1]} : vector<16x224xf32> to vector<16x32xf32>
    %29 = vector.extract_strided_slice %25 {offsets = [0, 160], sizes = [16, 32], strides = [1, 1]} : vector<16x224xf32> to vector<16x32xf32>
    %30 = vector.extract_strided_slice %25 {offsets = [0, 192], sizes = [16, 32], strides = [1, 1]} : vector<16x224xf32> to vector<16x32xf32>
    %31 = arith.mulf %26, %4 : vector<16x64xf32>
    %32 = arith.mulf %27, %5 : vector<16x64xf32>
    %33 = arith.addf %31, %32 : vector<16x64xf32>
    %34 = vector.extract_strided_slice %4 {offsets = [0, 0], sizes = [16, 32], strides = [1, 1]} : vector<16x64xf32> to vector<16x32xf32>
    %35 = arith.mulf %28, %34 : vector<16x32xf32>
    %36 = vector.extract_strided_slice %5 {offsets = [0, 0], sizes = [16, 32], strides = [1, 1]} : vector<16x64xf32> to vector<16x32xf32>
    %37 = arith.mulf %29, %36 : vector<16x32xf32>
    %38 = arith.addf %35, %37 : vector<16x32xf32>
    %39 = vector.extract_strided_slice %33 {offsets = [0, 0], sizes = [16, 16], strides = [1, 1]} : vector<16x64xf32> to vector<16x16xf32>
    %40 = vector.shape_cast %39 : vector<16x16xf32> to vector<2x8x16xf32>
    %41 = vector.extract_strided_slice %38 {offsets = [0, 0], sizes = [16, 16], strides = [1, 1]} : vector<16x32xf32> to vector<16x16xf32>
    %42 = vector.shape_cast %41 : vector<16x16xf32> to vector<2x8x16xf32>
    %43 = vector.extract_strided_slice %30 {offsets = [0, 0], sizes = [16, 16], strides = [1, 1]} : vector<16x32xf32> to vector<16x16xf32>
    %44 = vector.shape_cast %43 : vector<16x16xf32> to vector<2x8x16xf32>
    "tpu.trace_start"() <{level = 10 : i32, message = "bqd,bkd->bqk"}> : () -> ()
    %cst_19 = arith.constant dense<0.000000e+00> : vector<2x8x8xf32>
    %45 = tpu.matmul %40, %42, %cst_19 {dimension_numbers = #tpu.dot_dimension_numbers<[2], [2], [1], [1], [0, 0, 0, 1, 1, 1], [0], [0]>} : vector<2x8x16xf32>, vector<2x8x16xf32>, vector<2x8x8xf32> -> vector<2x8x8xf32>
    "tpu.trace_stop"() : () -> ()
    %cst_20 = arith.constant 2.500000e-01 : f32
    %46 = vector.broadcast %cst_20 : f32 to vector<2x8x8xf32>
    %47 = arith.mulf %45, %46 : vector<2x8x8xf32>
    %48 = arith.addf %47, %6 : vector<2x8x8xf32>
    %cst_21 = arith.constant dense<0xFF800000> : vector<2x8xf32>
    %49 = vector.multi_reduction <maximumf>, %48, %cst_21 [2] : vector<2x8x8xf32> to vector<2x8xf32>
    %50 = vector.shape_cast %49 : vector<2x8xf32> to vector<2x8x1xf32>
    %51 = vector.broadcast %50 : vector<2x8x1xf32> to vector<2x8x8xf32>
    %52 = arith.subf %48, %51 : vector<2x8x8xf32>
    %53 = math.exp %52 : vector<2x8x8xf32>
    %cst_22 = arith.constant dense<0.000000e+00> : vector<2x8xf32>
    %54 = vector.multi_reduction <add>, %53, %cst_22 [2] : vector<2x8x8xf32> to vector<2x8xf32>
    %55 = vector.shape_cast %54 : vector<2x8xf32> to vector<2x8x1xf32>
    %56 = tpu.reciprocal %55 {approx = true} : vector<2x8x1xf32> -> vector<2x8x1xf32>
    %57 = vector.broadcast %56 : vector<2x8x1xf32> to vector<2x8x8xf32>
    %58 = arith.mulf %53, %57 : vector<2x8x8xf32>
    "tpu.trace_start"() <{level = 10 : i32, message = "bqk,bkd->bqd"}> : () -> ()
    %cst_23 = arith.constant dense<0.000000e+00> : vector<2x8x16xf32>
    %59 = tpu.matmul %58, %44, %cst_23 {dimension_numbers = #tpu.dot_dimension_numbers<[2], [1], [1], [2], [0, 0, 0, 1, 1, 2], [0], [0]>} : vector<2x8x8xf32>, vector<2x8x16xf32>, vector<2x8x16xf32> -> vector<2x8x16xf32>
    "tpu.trace_stop"() : () -> ()
    %60 = vector.shape_cast %59 : vector<2x8x16xf32> to vector<16x16xf32>
    %61 = vector.extract_strided_slice %33 {offsets = [0, 16], sizes = [16, 16], strides = [1, 1]} : vector<16x64xf32> to vector<16x16xf32>
    %62 = vector.shape_cast %61 : vector<16x16xf32> to vector<2x8x16xf32>
    %63 = vector.extract_strided_slice %38 {offsets = [0, 0], sizes = [16, 16], strides = [1, 1]} : vector<16x32xf32> to vector<16x16xf32>
    %64 = vector.shape_cast %63 : vector<16x16xf32> to vector<2x8x16xf32>
    %65 = vector.extract_strided_slice %30 {offsets = [0, 0], sizes = [16, 16], strides = [1, 1]} : vector<16x32xf32> to vector<16x16xf32>
    %66 = vector.shape_cast %65 : vector<16x16xf32> to vector<2x8x16xf32>
    "tpu.trace_start"() <{level = 10 : i32, message = "bqd,bkd->bqk"}> : () -> ()
    %cst_24 = arith.constant dense<0.000000e+00> : vector<2x8x8xf32>
    %67 = tpu.matmul %62, %64, %cst_24 {dimension_numbers = #tpu.dot_dimension_numbers<[2], [2], [1], [1], [0, 0, 0, 1, 1, 1], [0], [0]>} : vector<2x8x16xf32>, vector<2x8x16xf32>, vector<2x8x8xf32> -> vector<2x8x8xf32>
    "tpu.trace_stop"() : () -> ()
    %cst_25 = arith.constant 2.500000e-01 : f32
    %68 = vector.broadcast %cst_25 : f32 to vector<2x8x8xf32>
    %69 = arith.mulf %67, %68 : vector<2x8x8xf32>
    %70 = arith.addf %69, %6 : vector<2x8x8xf32>
    %cst_26 = arith.constant dense<0xFF800000> : vector<2x8xf32>
    %71 = vector.multi_reduction <maximumf>, %70, %cst_26 [2] : vector<2x8x8xf32> to vector<2x8xf32>
    %72 = vector.shape_cast %71 : vector<2x8xf32> to vector<2x8x1xf32>
    %73 = vector.broadcast %72 : vector<2x8x1xf32> to vector<2x8x8xf32>
    %74 = arith.subf %70, %73 : vector<2x8x8xf32>
    %75 = math.exp %74 : vector<2x8x8xf32>
    %cst_27 = arith.constant dense<0.000000e+00> : vector<2x8xf32>
    %76 = vector.multi_reduction <add>, %75, %cst_27 [2] : vector<2x8x8xf32> to vector<2x8xf32>
    %77 = vector.shape_cast %76 : vector<2x8xf32> to vector<2x8x1xf32>
    %78 = tpu.reciprocal %77 {approx = true} : vector<2x8x1xf32> -> vector<2x8x1xf32>
    %79 = vector.broadcast %78 : vector<2x8x1xf32> to vector<2x8x8xf32>
    %80 = arith.mulf %75, %79 : vector<2x8x8xf32>
    "tpu.trace_start"() <{level = 10 : i32, message = "bqk,bkd->bqd"}> : () -> ()
    %cst_28 = arith.constant dense<0.000000e+00> : vector<2x8x16xf32>
    %81 = tpu.matmul %80, %66, %cst_28 {dimension_numbers = #tpu.dot_dimension_numbers<[2], [1], [1], [2], [0, 0, 0, 1, 1, 2], [0], [0]>} : vector<2x8x8xf32>, vector<2x8x16xf32>, vector<2x8x16xf32> -> vector<2x8x16xf32>
    "tpu.trace_stop"() : () -> ()
    %82 = vector.shape_cast %81 : vector<2x8x16xf32> to vector<16x16xf32>
    %83 = vector.extract_strided_slice %33 {offsets = [0, 32], sizes = [16, 16], strides = [1, 1]} : vector<16x64xf32> to vector<16x16xf32>
    %84 = vector.shape_cast %83 : vector<16x16xf32> to vector<2x8x16xf32>
    %85 = vector.extract_strided_slice %38 {offsets = [0, 16], sizes = [16, 16], strides = [1, 1]} : vector<16x32xf32> to vector<16x16xf32>
    %86 = vector.shape_cast %85 : vector<16x16xf32> to vector<2x8x16xf32>
    %87 = vector.extract_strided_slice %30 {offsets = [0, 16], sizes = [16, 16], strides = [1, 1]} : vector<16x32xf32> to vector<16x16xf32>
    %88 = vector.shape_cast %87 : vector<16x16xf32> to vector<2x8x16xf32>
    "tpu.trace_start"() <{level = 10 : i32, message = "bqd,bkd->bqk"}> : () -> ()
    %cst_29 = arith.constant dense<0.000000e+00> : vector<2x8x8xf32>
    %89 = tpu.matmul %84, %86, %cst_29 {dimension_numbers = #tpu.dot_dimension_numbers<[2], [2], [1], [1], [0, 0, 0, 1, 1, 1], [0], [0]>} : vector<2x8x16xf32>, vector<2x8x16xf32>, vector<2x8x8xf32> -> vector<2x8x8xf32>
    "tpu.trace_stop"() : () -> ()
    %cst_30 = arith.constant 2.500000e-01 : f32
    %90 = vector.broadcast %cst_30 : f32 to vector<2x8x8xf32>
    %91 = arith.mulf %89, %90 : vector<2x8x8xf32>
    %92 = arith.addf %91, %6 : vector<2x8x8xf32>
    %cst_31 = arith.constant dense<0xFF800000> : vector<2x8xf32>
    %93 = vector.multi_reduction <maximumf>, %92, %cst_31 [2] : vector<2x8x8xf32> to vector<2x8xf32>
    %94 = vector.shape_cast %93 : vector<2x8xf32> to vector<2x8x1xf32>
    %95 = vector.broadcast %94 : vector<2x8x1xf32> to vector<2x8x8xf32>
    %96 = arith.subf %92, %95 : vector<2x8x8xf32>
    %97 = math.exp %96 : vector<2x8x8xf32>
    %cst_32 = arith.constant dense<0.000000e+00> : vector<2x8xf32>
    %98 = vector.multi_reduction <add>, %97, %cst_32 [2] : vector<2x8x8xf32> to vector<2x8xf32>
    %99 = vector.shape_cast %98 : vector<2x8xf32> to vector<2x8x1xf32>
    %100 = tpu.reciprocal %99 {approx = true} : vector<2x8x1xf32> -> vector<2x8x1xf32>
    %101 = vector.broadcast %100 : vector<2x8x1xf32> to vector<2x8x8xf32>
    %102 = arith.mulf %97, %101 : vector<2x8x8xf32>
    "tpu.trace_start"() <{level = 10 : i32, message = "bqk,bkd->bqd"}> : () -> ()
    %cst_33 = arith.constant dense<0.000000e+00> : vector<2x8x16xf32>
    %103 = tpu.matmul %102, %88, %cst_33 {dimension_numbers = #tpu.dot_dimension_numbers<[2], [1], [1], [2], [0, 0, 0, 1, 1, 2], [0], [0]>} : vector<2x8x8xf32>, vector<2x8x16xf32>, vector<2x8x16xf32> -> vector<2x8x16xf32>
    "tpu.trace_stop"() : () -> ()
    %104 = vector.shape_cast %103 : vector<2x8x16xf32> to vector<16x16xf32>
    %105 = vector.extract_strided_slice %33 {offsets = [0, 48], sizes = [16, 16], strides = [1, 1]} : vector<16x64xf32> to vector<16x16xf32>
    %106 = vector.shape_cast %105 : vector<16x16xf32> to vector<2x8x16xf32>
    %107 = vector.extract_strided_slice %38 {offsets = [0, 16], sizes = [16, 16], strides = [1, 1]} : vector<16x32xf32> to vector<16x16xf32>
    %108 = vector.shape_cast %107 : vector<16x16xf32> to vector<2x8x16xf32>
    %109 = vector.extract_strided_slice %30 {offsets = [0, 16], sizes = [16, 16], strides = [1, 1]} : vector<16x32xf32> to vector<16x16xf32>
    %110 = vector.shape_cast %109 : vector<16x16xf32> to vector<2x8x16xf32>
    "tpu.trace_start"() <{level = 10 : i32, message = "bqd,bkd->bqk"}> : () -> ()
    %cst_34 = arith.constant dense<0.000000e+00> : vector<2x8x8xf32>
    %111 = tpu.matmul %106, %108, %cst_34 {dimension_numbers = #tpu.dot_dimension_numbers<[2], [2], [1], [1], [0, 0, 0, 1, 1, 1], [0], [0]>} : vector<2x8x16xf32>, vector<2x8x16xf32>, vector<2x8x8xf32> -> vector<2x8x8xf32>
    "tpu.trace_stop"() : () -> ()
    %cst_35 = arith.constant 2.500000e-01 : f32
    %112 = vector.broadcast %cst_35 : f32 to vector<2x8x8xf32>
    %113 = arith.mulf %111, %112 : vector<2x8x8xf32>
    %114 = arith.addf %113, %6 : vector<2x8x8xf32>
    %cst_36 = arith.constant dense<0xFF800000> : vector<2x8xf32>
    %115 = vector.multi_reduction <maximumf>, %114, %cst_36 [2] : vector<2x8x8xf32> to vector<2x8xf32>
    %116 = vector.shape_cast %115 : vector<2x8xf32> to vector<2x8x1xf32>
    %117 = vector.broadcast %116 : vector<2x8x1xf32> to vector<2x8x8xf32>
    %118 = arith.subf %114, %117 : vector<2x8x8xf32>
    %119 = math.exp %118 : vector<2x8x8xf32>
    %cst_37 = arith.constant dense<0.000000e+00> : vector<2x8xf32>
    %120 = vector.multi_reduction <add>, %119, %cst_37 [2] : vector<2x8x8xf32> to vector<2x8xf32>
    %121 = vector.shape_cast %120 : vector<2x8xf32> to vector<2x8x1xf32>
    %122 = tpu.reciprocal %121 {approx = true} : vector<2x8x1xf32> -> vector<2x8x1xf32>
    %123 = vector.broadcast %122 : vector<2x8x1xf32> to vector<2x8x8xf32>
    %124 = arith.mulf %119, %123 : vector<2x8x8xf32>
    "tpu.trace_start"() <{level = 10 : i32, message = "bqk,bkd->bqd"}> : () -> ()
    %cst_38 = arith.constant dense<0.000000e+00> : vector<2x8x16xf32>
    %125 = tpu.matmul %124, %110, %cst_38 {dimension_numbers = #tpu.dot_dimension_numbers<[2], [1], [1], [2], [0, 0, 0, 1, 1, 2], [0], [0]>} : vector<2x8x8xf32>, vector<2x8x16xf32>, vector<2x8x16xf32> -> vector<2x8x16xf32>
    "tpu.trace_stop"() : () -> ()
    %126 = vector.shape_cast %125 : vector<2x8x16xf32> to vector<16x16xf32>
    %127 = tpu.concatenate %60, %82, %104, %126 in 1 : vector<16x16xf32>, vector<16x16xf32>, vector<16x16xf32>, vector<16x16xf32> -> vector<16x64xf32>
    %c0_39 = arith.constant 0 : index
    %c0_40 = arith.constant 0 : index
    %c0_41 = arith.constant 0 : index
    %128 = vector.load %arg7[%c0_39, %c0_40, %c0_41] : memref<1x64x64xf32, #tpu.memory_space<vmem>>, vector<1x64x64xf32>
    %129 = vector.shape_cast %128 : vector<1x64x64xf32> to vector<64x64xf32>
    %cst_42 = arith.constant dense<0.000000e+00> : vector<16x64xf32>
    %130 = tpu.matmul %127, %129, %cst_42 {dimension_numbers = #tpu.dot_dimension_numbers<[1], [0], [0], [1], [0, 0, 1, 1], [], []>} : vector<16x64xf32>, vector<64x64xf32>, vector<16x64xf32> -> vector<16x64xf32>
    %131 = arith.addf %3, %130 : vector<16x64xf32>
    %c0_43 = arith.constant 0 : index
    %c0_44 = arith.constant 0 : index
    %c0_45 = arith.constant 0 : index
    %132 = vector.load %arg8[%c0_43, %c0_44, %c0_45] : memref<1x1x64xf32, #tpu.memory_space<vmem>>, vector<1x1x64xf32>
    %133 = vector.shape_cast %132 : vector<1x1x64xf32> to vector<1x64xf32>
    %134 = arith.mulf %131, %131 : vector<16x64xf32>
    %cst_46 = arith.constant dense<0.000000e+00> : vector<16xf32>
    %135 = vector.multi_reduction <add>, %134, %cst_46 [1] : vector<16x64xf32> to vector<16xf32>
    %136 = vector.shape_cast %135 : vector<16xf32> to vector<16x1xf32>
    %cst_47 = arith.constant 6.400000e+01 : f32
    %137 = vector.broadcast %cst_47 : f32 to vector<16x1xf32>
    %138 = arith.divf %136, %137 : vector<16x1xf32>
    %cst_48 = arith.constant 9.99999997E-7 : f32
    %139 = vector.broadcast %cst_48 : f32 to vector<16x1xf32>
    %140 = arith.addf %138, %139 : vector<16x1xf32>
    %141 = math.rsqrt %140 : vector<16x1xf32>
    %142 = vector.broadcast %141 : vector<16x1xf32> to vector<16x64xf32>
    %143 = arith.mulf %131, %142 : vector<16x64xf32>
    %cst_49 = arith.constant 1.000000e+00 : f32
    %144 = vector.broadcast %cst_49 : f32 to vector<1x64xf32>
    %145 = arith.addf %144, %133 : vector<1x64xf32>
    %146 = vector.broadcast %145 : vector<1x64xf32> to vector<16x64xf32>
    %147 = arith.mulf %143, %146 : vector<16x64xf32>
    %c0_50 = arith.constant 0 : index
    %c0_51 = arith.constant 0 : index
    %c0_52 = arith.constant 0 : index
    %148 = vector.load %arg9[%c0_50, %c0_51, %c0_52] : memref<1x64x256xf32, #tpu.memory_space<vmem>>, vector<1x64x256xf32>
    %149 = vector.shape_cast %148 : vector<1x64x256xf32> to vector<64x256xf32>
    %cst_53 = arith.constant dense<0.000000e+00> : vector<16x256xf32>
    %150 = tpu.matmul %147, %149, %cst_53 {dimension_numbers = #tpu.dot_dimension_numbers<[1], [0], [0], [1], [0, 0, 1, 1], [], []>} : vector<16x64xf32>, vector<64x256xf32>, vector<16x256xf32> -> vector<16x256xf32>
    %151 = vector.extract_strided_slice %150 {offsets = [0, 0], sizes = [16, 128], strides = [1, 1]} : vector<16x256xf32> to vector<16x128xf32>
    %cst_54 = arith.constant 5.000000e-01 : f32
    %152 = vector.broadcast %cst_54 : f32 to vector<16x128xf32>
    %153 = arith.mulf %152, %151 : vector<16x128xf32>
    %cst_55 = arith.constant 4.471500e-02 : f32
    %154 = vector.broadcast %cst_55 : f32 to vector<16x128xf32>
    %155 = arith.mulf %154, %151 : vector<16x128xf32>
    %156 = arith.mulf %155, %151 : vector<16x128xf32>
    %157 = arith.mulf %156, %151 : vector<16x128xf32>
    %158 = arith.addf %151, %157 : vector<16x128xf32>
    %cst_56 = arith.constant 0.797884583 : f32
    %159 = vector.broadcast %cst_56 : f32 to vector<16x128xf32>
    %160 = arith.mulf %159, %158 : vector<16x128xf32>
    %161 = math.tanh %160 : vector<16x128xf32>
    %cst_57 = arith.constant 1.000000e+00 : f32
    %162 = vector.broadcast %cst_57 : f32 to vector<16x128xf32>
    %163 = arith.addf %162, %161 : vector<16x128xf32>
    %164 = arith.mulf %153, %163 : vector<16x128xf32>
    %165 = vector.extract_strided_slice %150 {offsets = [0, 128], sizes = [16, 128], strides = [1, 1]} : vector<16x256xf32> to vector<16x128xf32>
    %166 = arith.mulf %164, %165 : vector<16x128xf32>
    %c0_58 = arith.constant 0 : index
    %c0_59 = arith.constant 0 : index
    %c0_60 = arith.constant 0 : index
    %167 = vector.load %arg10[%c0_58, %c0_59, %c0_60] : memref<1x128x64xf32, #tpu.memory_space<vmem>>, vector<1x128x64xf32>
    %168 = vector.shape_cast %167 : vector<1x128x64xf32> to vector<128x64xf32>
    %cst_61 = arith.constant dense<0.000000e+00> : vector<16x64xf32>
    %169 = tpu.matmul %166, %168, %cst_61 {dimension_numbers = #tpu.dot_dimension_numbers<[1], [0], [0], [1], [0, 0, 1, 1], [], []>} : vector<16x128xf32>, vector<128x64xf32>, vector<16x64xf32> -> vector<16x64xf32>
    %170 = arith.addf %131, %169 : vector<16x64xf32>
    %c0_62 = arith.constant 0 : index
    %c0_63 = arith.constant 0 : index
    %171 = vector.load %arg15[%c0_62, %c0_63] : memref<16x64xf32, #tpu.memory_space<vmem>>, vector<16x64xf32>
    tpu.vector_store %arg15[%c0_62, %c0_63], %170 {strides = array<i32>} : memref<16x64xf32, #tpu.memory_space<vmem>>, vector<16x64xf32>,
    %c1_i32 = arith.constant 1 : i32
    %172 = arith.cmpi eq, %arg0, %c1_i32 : i32
    %173 = arith.extui %172 : i1 to i32
    %c0_i32_64 = arith.constant 0 : i32
    %174 = arith.cmpi ne, %173, %c0_i32_64 : i32
    scf.if %174 {
      %c0_65 = arith.constant 0 : index
      %c0_66 = arith.constant 0 : index
      %175 = vector.load %arg11[%c0_65, %c0_66] : memref<1x64xf32, #tpu.memory_space<vmem>>, vector<1x64xf32>
      %176 = arith.mulf %170, %170 : vector<16x64xf32>
      %cst_67 = arith.constant dense<0.000000e+00> : vector<16xf32>
      %177 = vector.multi_reduction <add>, %176, %cst_67 [1] : vector<16x64xf32> to vector<16xf32>
      %178 = vector.shape_cast %177 : vector<16xf32> to vector<16x1xf32>
      %cst_68 = arith.constant 6.400000e+01 : f32
      %179 = vector.broadcast %cst_68 : f32 to vector<16x1xf32>
      %180 = arith.divf %178, %179 : vector<16x1xf32>
      %cst_69 = arith.constant 9.99999997E-7 : f32
      %181 = vector.broadcast %cst_69 : f32 to vector<16x1xf32>
      %182 = arith.addf %180, %181 : vector<16x1xf32>
      %183 = math.rsqrt %182 : vector<16x1xf32>
      %184 = vector.broadcast %183 : vector<16x1xf32> to vector<16x64xf32>
      %185 = arith.mulf %170, %184 : vector<16x64xf32>
      %cst_70 = arith.constant 1.000000e+00 : f32
      %186 = vector.broadcast %cst_70 : f32 to vector<1x64xf32>
      %187 = arith.addf %186, %175 : vector<1x64xf32>
      %188 = vector.broadcast %187 : vector<1x64xf32> to vector<16x64xf32>
      %189 = arith.mulf %185, %188 : vector<16x64xf32>
      %c0_71 = arith.constant 0 : index
      %c0_72 = arith.constant 0 : index
      %190 = vector.load %arg13[%c0_71, %c0_72] : memref<16x64xf32, #tpu.memory_space<vmem>>, vector<16x64xf32>
      tpu.vector_store %arg13[%c0_71, %c0_72], %189 {strides = array<i32>} : memref<16x64xf32, #tpu.memory_space<vmem>>, vector<16x64xf32>,
      %c0_73 = arith.constant 0 : index
      %c0_74 = arith.constant 0 : index
      %191 = vector.load %arg12[%c0_73, %c0_74] : memref<64x128xf32, #tpu.memory_space<vmem>>, vector<64x128xf32>
      %cst_75 = arith.constant dense<0.000000e+00> : vector<16x128xf32>
      %192 = tpu.matmul %189, %191, %cst_75 {dimension_numbers = #tpu.dot_dimension_numbers<[1], [0], [0], [1], [0, 0, 1, 1], [], []>} : vector<16x64xf32>, vector<64x128xf32>, vector<16x128xf32> -> vector<16x128xf32>
      %c0_76 = arith.constant 0 : index
      %c0_77 = arith.constant 0 : index
      %193 = vector.load %arg14[%c0_76, %c0_77] : memref<16x128xf32, #tpu.memory_space<vmem>>, vector<16x128xf32>
      tpu.vector_store %arg14[%c0_76, %c0_77], %192 {strides = array<i32>} : memref<16x128xf32, #tpu.memory_space<vmem>>, vector<16x128xf32>,
    } else {
    }
    return
  }
  func.func @transform_0(%arg0: i32) -> (i32, i32) {
    %c0_i32 = arith.constant 0 : i32
    %c0_i32_0 = arith.constant 0 : i32
    %c0_i32_1 = arith.constant 0 : i32
    return %c0_i32, %c0_i32_0 : i32, i32
  }
  func.func @transform_1(%arg0: i32) -> (i32, i32, i32) {
    %c0_i32 = arith.constant 0 : i32
    %c0_i32_0 = arith.constant 0 : i32
    %c0_i32_1 = arith.constant 0 : i32
    %c0_i32_2 = arith.constant 0 : i32
    return %c0_i32, %c0_i32_0, %c0_i32_1 : i32, i32, i32
  }
  func.func @transform_2(%arg0: i32) -> (i32, i32) {
    %c0_i32 = arith.constant 0 : i32
    %c0_i32_0 = arith.constant 0 : i32
    %c0_i32_1 = arith.constant 0 : i32
    return %c0_i32, %c0_i32_0 : i32, i32
  }
  func.func @transform_3(%arg0: i32) -> (i32, i32) {
    %c0_i32 = arith.constant 0 : i32
    %c0_i32_0 = arith.constant 0 : i32
    %c0_i32_1 = arith.constant 0 : i32
    return %c0_i32, %c0_i32_0 : i32, i32
  }
  func.func @transform_4(%arg0: i32) -> (i32, i32, i32) {
    %c0_i32 = arith.constant 0 : i32
    %c0_i32_0 = arith.constant 0 : i32
    %c0_i32_1 = arith.constant 0 : i32
    return %arg0, %c0_i32, %c0_i32_0 : i32, i32, i32
  }
  func.func @transform_5(%arg0: i32) -> (i32, i32, i32) {
    %c0_i32 = arith.constant 0 : i32
    %c0_i32_0 = arith.constant 0 : i32
    %c0_i32_1 = arith.constant 0 : i32
    return %arg0, %c0_i32, %c0_i32_0 : i32, i32, i32
  }
  func.func @transform_6(%arg0: i32) -> (i32, i32, i32) {
    %c0_i32 = arith.constant 0 : i32
    %c0_i32_0 = arith.constant 0 : i32
    %c0_i32_1 = arith.constant 0 : i32
    return %arg0, %c0_i32, %c0_i32_0 : i32, i32, i32
  }
  func.func @transform_7(%arg0: i32) -> (i32, i32, i32) {
    %c0_i32 = arith.constant 0 : i32
    %c0_i32_0 = arith.constant 0 : i32
    %c0_i32_1 = arith.constant 0 : i32
    return %arg0, %c0_i32, %c0_i32_0 : i32, i32, i32
  }
  func.func @transform_8(%arg0: i32) -> (i32, i32, i32) {
    %c0_i32 = arith.constant 0 : i32
    %c0_i32_0 = arith.constant 0 : i32
    %c0_i32_1 = arith.constant 0 : i32
    return %arg0, %c0_i32, %c0_i32_0 : i32, i32, i32
  }
  func.func @transform_9(%arg0: i32) -> (i32, i32, i32) {
    %c0_i32 = arith.constant 0 : i32
    %c0_i32_0 = arith.constant 0 : i32
    %c0_i32_1 = arith.constant 0 : i32
    return %arg0, %c0_i32, %c0_i32_0 : i32, i32, i32
  }
  func.func @transform_10(%arg0: i32) -> (i32, i32) {
    %c0_i32 = arith.constant 0 : i32
    %c0_i32_0 = arith.constant 0 : i32
    %c0_i32_1 = arith.constant 0 : i32
    return %c0_i32, %c0_i32_0 : i32, i32
  }
  func.func @transform_11(%arg0: i32) -> (i32, i32) {
    %c0_i32 = arith.constant 0 : i32
    %c0_i32_0 = arith.constant 0 : i32
    %c0_i32_1 = arith.constant 0 : i32
    return %c0_i32, %c0_i32_0 : i32, i32
  }
  func.func @transform_12(%arg0: i32) -> (i32, i32) {
    %c0_i32 = arith.constant 0 : i32
    %c0_i32_0 = arith.constant 0 : i32
    %c0_i32_1 = arith.constant 0 : i32
    return %c0_i32, %c0_i32_0 : i32, i32
  }
  func.func @transform_13(%arg0: i32) -> (i32, i32) {
    %c0_i32 = arith.constant 0 : i32
    %c0_i32_0 = arith.constant 0 : i32
    %c0_i32_1 = arith.constant 0 : i32
    return %c0_i32, %c0_i32_0 : i32, i32
  }
}

</mosaic_0001>

<llo_original>
// kernel: tpu_custom_call.1
$region0: #{tpu_custom_call.1}
  #allocation0 [shape = 'u32[]', space=smem, size = 0x4, offset = 0x4, fixed_abs, tag = 'smem constant byte address 0x4 - core index']
  #allocation1 [shape = 'u32[72,128]{1,0:T(1,128)}', space=vmem, size = 0x9000, scoped, tag = 'internal scratch']
  #allocation2 [shape = 'f32[16,64]{1,0:T(8,128)}', space=vmem, size = 0x2000, scoped, tag = 'scratch operand']
  %s0 = inlined_call_operand.hbm [shape: f32[16,64], index: 0, kind: input, shape index: {}]
  %s1 = inlined_call_operand.hbm [shape: f32[2,8,8], index: 1, kind: input, shape index: {}]
  %s2 = inlined_call_operand.hbm [shape: f32[16,64], index: 2, kind: input, shape index: {}]
  %s3 = inlined_call_operand.hbm [shape: f32[16,64], index: 3, kind: input, shape index: {}]
  %s4 = inlined_call_operand.vmem [shape: f32[2,1,64], index: 4, kind: input, shape index: {}]
  %s5 = inlined_call_operand.vmem [shape: f32[2,64,224], index: 5, kind: input, shape index: {}]
  %s6 = inlined_call_operand.vmem [shape: f32[2,64,64], index: 6, kind: input, shape index: {}]
  %s7 = inlined_call_operand.vmem [shape: f32[2,1,64], index: 7, kind: input, shape index: {}]
  %s8 = inlined_call_operand.hbm [shape: f32[2,64,256], index: 8, kind: input, shape index: {}]
  %s9 = inlined_call_operand.vmem [shape: f32[2,128,64], index: 9, kind: input, shape index: {}]
  %s10 = inlined_call_operand.vmem [shape: f32[1,64], index: 10, kind: input, shape index: {}]
  %s11 = inlined_call_operand.hbm [shape: f32[64,128], index: 11, kind: input, shape index: {}]
  %s12 = inlined_call_operand.hbm [shape: f32[16,64], index: 12, kind: output, shape index: {0}]
  %s13 = inlined_call_operand.hbm [shape: f32[16,128], index: 13, kind: output, shape index: {1}]
  %14 = xla_tuple %s12, %s13
  %s15 = sld [smem:[#allocation0]]
  $region121: #{tpu_custom_call.1} parent=0
    _
  %s17 = ssub.s32 1, %s15
  %s18 = scalar_select 0, %s17, %s15
  $region1: #{tpu_custom_call.1} parent=0
    #allocation3 [shape = 'u8[8192]{0}', space=vmem, size = 0x2000, scoped, tag = 'input window, operand 0, single buffered']
    #allocation4 [shape = 's32[2]{0}', space=sflag, size = 0x8, scoped, tag = 'scoped memory for tpu_custom_call.1']
    #allocation5 [shape = 's32[2]{0}', space=sflag, size = 0x8, scoped, tag = 'scoped memory for tpu_custom_call.1']
    #allocation6 [shape = 'u8[8192]{0}', space=vmem, size = 0x2000, scoped, tag = 'input window, operand 1, single buffered']
    #allocation7 [shape = 's32[1]{0}', space=sflag, size = 0x4, scoped, tag = 'scoped memory for tpu_custom_call.1']
    #allocation8 [shape = 'u8[8192]{0}', space=vmem, size = 0x2000, scoped, tag = 'input window, operand 2, single buffered']
    #allocation9 [shape = 'u8[8192]{0}', space=vmem, size = 0x2000, scoped, tag = 'input window, operand 3, single buffered']
    #allocation10 [shape = 's32[1]{0}', space=sflag, size = 0x4, scoped, tag = 'scoped memory for tpu_custom_call.1']
    #allocation11 [shape = 'u8[131072]{0}', space=vmem, size = 0x20000, scoped, tag = 'input window, operand 8']
    #allocation12 [shape = 'u8[32768]{0}', space=vmem, size = 0x8000, scoped, tag = 'input window, operand 11, single buffered']
    #allocation13 [shape = 'u8[8192]{0}', space=vmem, size = 0x2000, scoped, tag = 'output window, operand 0, single buffered']
    #allocation14 [shape = 'u8[8192]{0}', space=vmem, size = 0x2000, scoped, tag = 'output window, operand 1, single buffered']
    #allocation15 [shape = 's32[1]{0}', space=sflag, size = 0x4, scoped, tag = 'scoped memory for tpu_custom_call.1']
    %19 = vsyncpa [#allocation4], 0
    %20 = vsyncpa [#allocation7], 0
    %21 = vsyncpa [#allocation10], 0
    %22 = vsyncpa [#allocation5], 0
    %23 = vsyncpa [#allocation15], 0
    loop: start=0, step=1, limit=4
    $region2: #{tpu_custom_call.1} parent=1 // loop_pre_header
      _
    $region3: #{tpu_custom_call.1} parent=1 // loop_header
      %s25 = sphi 0, %s29
      %p26 = scmp.ge.s32.totalorder %s25, 4
      %s33 = sphi 0, %s33
      %s35 = sphi 0, %s33
      %s36 = sphi 0, %s35
      %s50 = sphi 0, %s36
      %s54 = sphi 0, %s54
      %s56 = sphi 0, %s54
      %s57 = sphi 0, %s56
      %s71 = sphi 0, %s57
      %s75 = sphi 0, %s75
      %s77 = sphi 0, %s75
      %s78 = sphi 0, %s77
      %s92 = sphi 0, %s78
      %s96 = sphi 0, %s96
      %s98 = sphi 0, %s96
      %s99 = sphi 0, %s98
      %s113 = sphi 0, %s99
      %s119 = sphi 0, %s121
      %s122 = sphi 0, %s119
      %s123 = sphi 0, %s122
      %s139 = sphi 0, %s123
      %s145 = sphi 0, %s147
      %s148 = sphi 0, %s145
      %s149 = sphi 0, %s148
      %s165 = sphi 0, %s149
      %s171 = sphi 0, %s173
      %s174 = sphi 0, %s171
      %s175 = sphi 0, %s174
      %s191 = sphi 0, %s175
      %s197 = sphi 0, %s199
      %s200 = sphi 0, %s197
      %s201 = sphi 0, %s200
      %s217 = sphi 0, %s201
      %s223 = sphi 0, %s225
      %s226 = sphi 0, %s223
      %s227 = sphi 0, %s226
      %s243 = sphi 0, %s227
      %s249 = sphi 0, %s251
      %s252 = sphi 0, %s249
      %s253 = sphi 0, %s252
      %s269 = sphi 0, %s253
      %s273 = sphi 0, %s273
      %s275 = sphi 0, %s273
      %s276 = sphi 0, %s275
      %s290 = sphi 0, %s276
      %s294 = sphi 0, %s294
      %s296 = sphi 0, %s294
      %s297 = sphi 0, %s296
      %s311 = sphi 0, %s297
      %s315 = sphi 0, %s315
      %s317 = sphi 0, %s315
      %s318 = sphi 0, %s317
      %s332 = sphi 0, %s318
      %s336 = sphi 0, %s336
      %s338 = sphi 0, %s336
      %s339 = sphi 0, %s338
      %s353 = sphi 0, %s339
    $region4: #{tpu_custom_call.1} parent=1 // loop_header_branch
      %28 = sbr.rel (%p26) target = $region8
    $region5: #{tpu_custom_call.1} parent=1 // loop_body
      %s30 = ssub.s32 %s25, 1
      %s31 = ssub.s32 %s25, 2
      %s32 = sadd.s32 %s25, 1
      %s34 = sadd.s32 %s33, 1
      %p37 = scmp.eq.s32.totalorder %s25, 1
      %p38 = scmp.ne.s32.totalorder %s33, %s35
      %p39 = scmp.eq.s32.totalorder %s25, 0
      %p40 = por %p38, %p39
      %p41 = scmp.ne.s32.totalorder %s33, %s35
      %p42 = scmp.eq.s32.totalorder %s30, 1
      %p43 = por %p41, %p42
      %p44 = scmp.ne.s32.totalorder %s35, %s36
      %p45 = scmp.eq.s32.totalorder %s30, 0
      %p46 = por %p44, %p45
      %p47 = scmp.ne.s32.totalorder %s35, %s36
      %p48 = scmp.eq.s32.totalorder %s31, 1
      %p49 = por %p47, %p48
      %p51 = scmp.ne.s32.totalorder %s36, %s50
      %p52 = scmp.eq.s32.totalorder %s31, 0
      %p53 = por %p51, %p52
      %s55 = sadd.s32 %s54, 1
      %p58 = scmp.eq.s32.totalorder %s25, 1
      %p59 = scmp.ne.s32.totalorder %s54, %s56
      %p60 = scmp.eq.s32.totalorder %s25, 0
      %p61 = por %p59, %p60
      %p62 = scmp.ne.s32.totalorder %s54, %s56
      %p63 = scmp.eq.s32.totalorder %s30, 1
      %p64 = por %p62, %p63
      %p65 = scmp.ne.s32.totalorder %s56, %s57
      %p66 = scmp.eq.s32.totalorder %s30, 0
      %p67 = por %p65, %p66
      %p68 = scmp.ne.s32.totalorder %s56, %s57
      %p69 = scmp.eq.s32.totalorder %s31, 1
      %p70 = por %p68, %p69
      %p72 = scmp.ne.s32.totalorder %s57, %s71
      %p73 = scmp.eq.s32.totalorder %s31, 0
      %p74 = por %p72, %p73
      %s76 = sadd.s32 %s75, 1
      %p79 = scmp.eq.s32.totalorder %s25, 1
      %p80 = scmp.ne.s32.totalorder %s75, %s77
      %p81 = scmp.eq.s32.totalorder %s25, 0
      %p82 = por %p80, %p81
      %p83 = scmp.ne.s32.totalorder %s75, %s77
      %p84 = scmp.eq.s32.totalorder %s30, 1
      %p85 = por %p83, %p84
      %p86 = scmp.ne.s32.totalorder %s77, %s78
      %p87 = scmp.eq.s32.totalorder %s30, 0
      %p88 = por %p86, %p87
      %p89 = scmp.ne.s32.totalorder %s77, %s78
      %p90 = scmp.eq.s32.totalorder %s31, 1
      %p91 = por %p89, %p90
      %p93 = scmp.ne.s32.totalorder %s78, %s92
      %p94 = scmp.eq.s32.totalorder %s31, 0
      %p95 = por %p93, %p94
      %s97 = sadd.s32 %s96, 1
      %p100 = scmp.eq.s32.totalorder %s25, 1
      %p101 = scmp.ne.s32.totalorder %s96, %s98
      %p102 = scmp.eq.s32.totalorder %s25, 0
      %p103 = por %p101, %p102
      %p104 = scmp.ne.s32.totalorder %s96, %s98
      %p105 = scmp.eq.s32.totalorder %s30, 1
      %p106 = por %p104, %p105
      %p107 = scmp.ne.s32.totalorder %s98, %s99
      %p108 = scmp.eq.s32.totalorder %s30, 0
      %p109 = por %p107, %p108
      %p110 = scmp.ne.s32.totalorder %s98, %s99
      %p111 = scmp.eq.s32.totalorder %s31, 1
      %p112 = por %p110, %p111
      %p114 = scmp.ne.s32.totalorder %s99, %s113
      %p115 = scmp.eq.s32.totalorder %s31, 0
      %p116 = por %p114, %p115
      %s117 = ssub.s32 %s25, %s32
      %p118 = scmp.eq.s32.totalorder %s117, 0
      %s120 = sadd.s32 %s119, 1
      %s121 = scalar_select %p118, %s119, %s120
      %p124 = pneg %p118
      %p125 = scmp.eq.s32.totalorder %s25, 1
      %p126 = por %p124, %p125
      %p127 = scmp.ne.s32.totalorder %s119, %s122
      %p128 = scmp.eq.s32.totalorder %s25, 0
      %p129 = por %p127, %p128
      %p130 = scmp.ne.s32.totalorder %s119, %s122
      %p131 = scmp.eq.s32.totalorder %s30, 1
      %p132 = por %p130, %p131
      %p133 = scmp.ne.s32.totalorder %s122, %s123
      %p134 = scmp.eq.s32.totalorder %s30, 0
      %p135 = por %p133, %p134
      %p136 = scmp.ne.s32.totalorder %s122, %s123
      %p137 = scmp.eq.s32.totalorder %s31, 1
      %p138 = por %p136, %p137
      %p140 = scmp.ne.s32.totalorder %s123, %s139
      %p141 = scmp.eq.s32.totalorder %s31, 0
      %p142 = por %p140, %p141
      %s143 = ssub.s32 %s25, %s32
      %p144 = scmp.eq.s32.totalorder %s143, 0
      %s146 = sadd.s32 %s145, 1
      %s147 = scalar_select %p144, %s145, %s146
      %p150 = pneg %p144
      %p151 = scmp.eq.s32.totalorder %s25, 1
      %p152 = por %p150, %p151
      %p153 = scmp.ne.s32.totalorder %s145, %s148
      %p154 = scmp.eq.s32.totalorder %s25, 0
      %p155 = por %p153, %p154
      %p156 = scmp.ne.s32.totalorder %s145, %s148
      %p157 = scmp.eq.s32.totalorder %s30, 1
      %p158 = por %p156, %p157
      %p159 = scmp.ne.s32.totalorder %s148, %s149
      %p160 = scmp.eq.s32.totalorder %s30, 0
      %p161 = por %p159, %p160
      %p162 = scmp.ne.s32.totalorder %s148, %s149
      %p163 = scmp.eq.s32.totalorder %s31, 1
      %p164 = por %p162, %p163
      %p166 = scmp.ne.s32.totalorder %s149, %s165
      %p167 = scmp.eq.s32.totalorder %s31, 0
      %p168 = por %p166, %p167
      %s169 = ssub.s32 %s25, %s32
      %p170 = scmp.eq.s32.totalorder %s169, 0
      %s172 = sadd.s32 %s171, 1
      %s173 = scalar_select %p170, %s171, %s172
      %p176 = pneg %p170
      %p177 = scmp.eq.s32.totalorder %s25, 1
      %p178 = por %p176, %p177
      %p179 = scmp.ne.s32.totalorder %s171, %s174
      %p180 = scmp.eq.s32.totalorder %s25, 0
      %p181 = por %p179, %p180
      %p182 = scmp.ne.s32.totalorder %s171, %s174
      %p183 = scmp.eq.s32.totalorder %s30, 1
      %p184 = por %p182, %p183
      %p185 = scmp.ne.s32.totalorder %s174, %s175
      %p186 = scmp.eq.s32.totalorder %s30, 0
      %p187 = por %p185, %p186
      %p188 = scmp.ne.s32.totalorder %s174, %s175
      %p189 = scmp.eq.s32.totalorder %s31, 1
      %p190 = por %p188, %p189
      %p192 = scmp.ne.s32.totalorder %s175, %s191
      %p193 = scmp.eq.s32.totalorder %s31, 0
      %p194 = por %p192, %p193
      %s195 = ssub.s32 %s25, %s32
      %p196 = scmp.eq.s32.totalorder %s195, 0
      %s198 = sadd.s32 %s197, 1
      %s199 = scalar_select %p196, %s197, %s198
      %p202 = pneg %p196
      %p203 = scmp.eq.s32.totalorder %s25, 1
      %p204 = por %p202, %p203
      %p205 = scmp.ne.s32.totalorder %s197, %s200
      %p206 = scmp.eq.s32.totalorder %s25, 0
      %p207 = por %p205, %p206
      %p208 = scmp.ne.s32.totalorder %s197, %s200
      %p209 = scmp.eq.s32.totalorder %s30, 1
      %p210 = por %p208, %p209
      %p211 = scmp.ne.s32.totalorder %s200, %s201
      %p212 = scmp.eq.s32.totalorder %s30, 0
      %p213 = por %p211, %p212
      %p214 = scmp.ne.s32.totalorder %s200, %s201
      %p215 = scmp.eq.s32.totalorder %s31, 1
      %p216 = por %p214, %p215
      %p218 = scmp.ne.s32.totalorder %s201, %s217
      %p219 = scmp.eq.s32.totalorder %s31, 0
      %p220 = por %p218, %p219
      %s221 = ssub.s32 %s25, %s32
      %p222 = scmp.eq.s32.totalorder %s221, 0
      %s224 = sadd.s32 %s223, 1
      %s225 = scalar_select %p222, %s223, %s224
      %p228 = pneg %p222
      %p229 = scmp.eq.s32.totalorder %s25, 1
      %p230 = por %p228, %p229
      %p231 = scmp.ne.s32.totalorder %s223, %s226
      %p232 = scmp.eq.s32.totalorder %s25, 0
      %p233 = por %p231, %p232
      %p234 = scmp.ne.s32.totalorder %s223, %s226
      %p235 = scmp.eq.s32.totalorder %s30, 1
      %p236 = por %p234, %p235
      %p237 = scmp.ne.s32.totalorder %s226, %s227
      %p238 = scmp.eq.s32.totalorder %s30, 0
      %p239 = por %p237, %p238
      %p240 = scmp.ne.s32.totalorder %s226, %s227
      %p241 = scmp.eq.s32.totalorder %s31, 1
      %p242 = por %p240, %p241
      %p244 = scmp.ne.s32.totalorder %s227, %s243
      %p245 = scmp.eq.s32.totalorder %s31, 0
      %p246 = por %p244, %p245
      %s247 = ssub.s32 %s25, %s32
      %p248 = scmp.eq.s32.totalorder %s247, 0
      %s250 = sadd.s32 %s249, 1
      %s251 = scalar_select %p248, %s249, %s250
      %p254 = pneg %p248
      %p255 = scmp.eq.s32.totalorder %s25, 1
      %p256 = por %p254, %p255
      %p257 = scmp.ne.s32.totalorder %s249, %s252
      %p258 = scmp.eq.s32.totalorder %s25, 0
      %p259 = por %p257, %p258
      %p260 = scmp.ne.s32.totalorder %s249, %s252
      %p261 = scmp.eq.s32.totalorder %s30, 1
      %p262 = por %p260, %p261
      %p263 = scmp.ne.s32.totalorder %s252, %s253
      %p264 = scmp.eq.s32.totalorder %s30, 0
      %p265 = por %p263, %p264
      %p266 = scmp.ne.s32.totalorder %s252, %s253
      %p267 = scmp.eq.s32.totalorder %s31, 1
      %p268 = por %p266, %p267
      %p270 = scmp.ne.s32.totalorder %s253, %s269
      %p271 = scmp.eq.s32.totalorder %s31, 0
      %p272 = por %p270, %p271
      %s274 = sadd.s32 %s273, 1
      %p277 = scmp.eq.s32.totalorder %s25, 1
      %p278 = scmp.ne.s32.totalorder %s273, %s275
      %p279 = scmp.eq.s32.totalorder %s25, 0
      %p280 = por %p278, %p279
      %p281 = scmp.ne.s32.totalorder %s273, %s275
      %p282 = scmp.eq.s32.totalorder %s30, 1
      %p283 = por %p281, %p282
      %p284 = scmp.ne.s32.totalorder %s275, %s276
      %p285 = scmp.eq.s32.totalorder %s30, 0
      %p286 = por %p284, %p285
      %p287 = scmp.ne.s32.totalorder %s275, %s276
      %p288 = scmp.eq.s32.totalorder %s31, 1
      %p289 = por %p287, %p288
      %p291 = scmp.ne.s32.totalorder %s276, %s290
      %p292 = scmp.eq.s32.totalorder %s31, 0
      %p293 = por %p291, %p292
      %s295 = sadd.s32 %s294, 1
      %p298 = scmp.eq.s32.totalorder %s25, 1
      %p299 = scmp.ne.s32.totalorder %s294, %s296
      %p300 = scmp.eq.s32.totalorder %s25, 0
      %p301 = por %p299, %p300
      %p302 = scmp.ne.s32.totalorder %s294, %s296
      %p303 = scmp.eq.s32.totalorder %s30, 1
      %p304 = por %p302, %p303
      %p305 = scmp.ne.s32.totalorder %s296, %s297
      %p306 = scmp.eq.s32.totalorder %s30, 0
      %p307 = por %p305, %p306
      %p308 = scmp.ne.s32.totalorder %s296, %s297
      %p309 = scmp.eq.s32.totalorder %s31, 1
      %p310 = por %p308, %p309
      %p312 = scmp.ne.s32.totalorder %s297, %s311
      %p313 = scmp.eq.s32.totalorder %s31, 0
      %p314 = por %p312, %p313
      %s316 = sadd.s32 %s315, 1
      %p319 = scmp.eq.s32.totalorder %s25, 1
      %p320 = scmp.ne.s32.totalorder %s315, %s317
      %p321 = scmp.eq.s32.totalorder %s25, 0
      %p322 = por %p320, %p321
      %p323 = scmp.ne.s32.totalorder %s315, %s317
      %p324 = scmp.eq.s32.totalorder %s30, 1
      %p325 = por %p323, %p324
      %p326 = scmp.ne.s32.totalorder %s317, %s318
      %p327 = scmp.eq.s32.totalorder %s30, 0
      %p328 = por %p326, %p327
      %p329 = scmp.ne.s32.totalorder %s317, %s318
      %p330 = scmp.eq.s32.totalorder %s31, 1
      %p331 = por %p329, %p330
      %p333 = scmp.ne.s32.totalorder %s318, %s332
      %p334 = scmp.eq.s32.totalorder %s31, 0
      %p335 = por %p333, %p334
      %s337 = sadd.s32 %s336, 1
      %p340 = scmp.eq.s32.totalorder %s25, 1
      %p341 = scmp.ne.s32.totalorder %s336, %s338
      %p342 = scmp.eq.s32.totalorder %s25, 0
      %p343 = por %p341, %p342
      %p344 = scmp.ne.s32.totalorder %s336, %s338
      %p345 = scmp.eq.s32.totalorder %s30, 1
      %p346 = por %p344, %p345
      %p347 = scmp.ne.s32.totalorder %s338, %s339
      %p348 = scmp.eq.s32.totalorder %s30, 0
      %p349 = por %p347, %p348
      %p350 = scmp.ne.s32.totalorder %s338, %s339
      %p351 = scmp.eq.s32.totalorder %s31, 1
      %p352 = por %p350, %p351
      %p354 = scmp.ne.s32.totalorder %s339, %s353
      %p355 = scmp.eq.s32.totalorder %s31, 0
      %p356 = por %p354, %p355
      %p357 = scmp.le.s32.totalorder 1, %s25
      %p358 = scmp.lt.s32.totalorder %s25, 3
      %p359 = pnand %p357, %p358
      %p360 = pneg %p359
      // Predicated region
      $region9: #{tpu_custom_call.1} parent=5 // pred_check
        _
      $region10: #{tpu_custom_call.1} parent=5 // pred_check_branch
        %362 = sbr.rel (%p359) target = $region12
      $region11: #{tpu_custom_call.1} parent=5 // pred_region
        %s363 = ssub.s32 %s25, 1
        // Predicated region
        $region13: #{tpu_custom_call.1} parent=11 // pred_check
          %p364 = pneg %p46
        $region14: #{tpu_custom_call.1} parent=11 // pred_check_branch
          %366 = sbr.rel (%p364) target = $region16
        $region15: #{tpu_custom_call.1} parent=11 // pred_region
          %368 = vsyncadd [#allocation4], 0
          %s369 = sshll.u32 %s0, 4
          %s370 = int_to_ptr.hbm [resolvable:$true] %s369
          %s371 = sshll.u32 [#allocation3], 4
          %s372 = int_to_ptr.vmem [resolvable:$true] %s371
          %377 = dma.hbm_to_vmem [thread:$0]  %s370, 256, %s372, [#allocation4], 128, 128, 8
        $region16: #{tpu_custom_call.1} parent=11 // pred_fallthru
          _
        // Predicated region
        $region17: #{tpu_custom_call.1} parent=11 // pred_check
          %p378 = pneg %p67
        $region18: #{tpu_custom_call.1} parent=11 // pred_check_branch
          %380 = sbr.rel (%p378) target = $region20
        $region19: #{tpu_custom_call.1} parent=11 // pred_region
          %382 = vsyncadd [#allocation7], 0
          %s383 = sshll.u32 %s1, 4
          %s384 = int_to_ptr.hbm [resolvable:$true] %s383
          %s385 = sshll.u32 [#allocation6], 4
          %s386 = int_to_ptr.vmem [resolvable:$true] %s385
          %391 = dma.hbm_to_vmem [thread:$0]  %s384, 256, %s386, [#allocation7], 128, 128, 8
        $region20: #{tpu_custom_call.1} parent=11 // pred_fallthru
          _
        // Predicated region
        $region21: #{tpu_custom_call.1} parent=11 // pred_check
          %p392 = pneg %p88
        $region22: #{tpu_custom_call.1} parent=11 // pred_check_branch
          %394 = sbr.rel (%p392) target = $region24
        $region23: #{tpu_custom_call.1} parent=11 // pred_region
          %396 = vsyncadd [#allocation7], 0
          %s397 = sshll.u32 %s2, 4
          %s398 = int_to_ptr.hbm [resolvable:$true] %s397
          %s399 = sshll.u32 [#allocation8], 4
          %s400 = int_to_ptr.vmem [resolvable:$true] %s399
          %405 = dma.hbm_to_vmem [thread:$0]  %s398, 256, %s400, [#allocation7], 128, 128, 8
        $region24: #{tpu_custom_call.1} parent=11 // pred_fallthru
          _
        // Predicated region
        $region25: #{tpu_custom_call.1} parent=11 // pred_check
          %p406 = pneg %p109
        $region26: #{tpu_custom_call.1} parent=11 // pred_check_branch
          %408 = sbr.rel (%p406) target = $region28
        $region27: #{tpu_custom_call.1} parent=11 // pred_region
          %410 = vsyncadd [#allocation10], 0
          %s411 = sshll.u32 %s3, 4
          %s412 = int_to_ptr.hbm [resolvable:$true] %s411
          %s413 = sshll.u32 [#allocation9], 4
          %s414 = int_to_ptr.vmem [resolvable:$true] %s413
          %419 = dma.hbm_to_vmem [thread:$0]  %s412, 256, %s414, [#allocation10], 128, 128, 8
        $region28: #{tpu_custom_call.1} parent=11 // pred_fallthru
          _
        // Predicated region
        $region29: #{tpu_custom_call.1} parent=11 // pred_check
          %p420 = pneg %p286
        $region30: #{tpu_custom_call.1} parent=11 // pred_check_branch
          %422 = sbr.rel (%p420) target = $region32
        $region31: #{tpu_custom_call.1} parent=11 // pred_region
          _
        $region32: #{tpu_custom_call.1} parent=11 // pred_fallthru
          _
        // Predicated region
        $region33: #{tpu_custom_call.1} parent=11 // pred_check
          %p423 = pneg %p307
        $region34: #{tpu_custom_call.1} parent=11 // pred_check_branch
          %425 = sbr.rel (%p423) target = $region36
        $region35: #{tpu_custom_call.1} parent=11 // pred_region
          %427 = vsyncadd [#allocation7], 0
          %s428 = sshll.u32 %s11, 4
          %s429 = int_to_ptr.hbm [resolvable:$true] %s428
          %s430 = sshll.u32 [#allocation12], 4
          %s431 = int_to_ptr.vmem [resolvable:$true] %s430
          %436 = dma.hbm_to_vmem [thread:$0]  %s429, 1024, %s431, [#allocation7], 128, 128, 8
        $region36: #{tpu_custom_call.1} parent=11 // pred_fallthru
          _
      $region12: #{tpu_custom_call.1} parent=5 // pred_fallthru
        _
      %p437 = scmp.lt.s32.totalorder %s25, 2
      // Predicated region
      $region37: #{tpu_custom_call.1} parent=5 // pred_check
        %p438 = pneg %p437
      $region38: #{tpu_custom_call.1} parent=5 // pred_check_branch
        %440 = sbr.rel (%p438) target = $region40
      $region39: #{tpu_custom_call.1} parent=5 // pred_region
        // Predicated region
        $region41: #{tpu_custom_call.1} parent=39 // pred_check
          %p441 = pneg %p129
        $region42: #{tpu_custom_call.1} parent=39 // pred_check_branch
          %443 = sbr.rel (%p441) target = $region44
        $region43: #{tpu_custom_call.1} parent=39 // pred_region
          %p444 = scmp.lt.s32.totalorder %s25, 1
          %s445 = scalar_select %p444, %s25, 1
          %s446 = scalar_lea.vmem %s4, %s445
        $region44: #{tpu_custom_call.1} parent=39 // pred_fallthru
          _
        // Predicated region
        $region45: #{tpu_custom_call.1} parent=39 // pred_check
          %p447 = pneg %p155
        $region46: #{tpu_custom_call.1} parent=39 // pred_check_branch
          %449 = sbr.rel (%p447) target = $region48
        $region47: #{tpu_custom_call.1} parent=39 // pred_region
          %p450 = scmp.lt.s32.totalorder %s25, 1
          %s451 = scalar_select %p450, %s25, 1
          %s452 = smul.addr %s451, 16
          %s453 = smul.addr %s452, 8
          %s454 = scalar_lea.vmem %s5, %s453
        $region48: #{tpu_custom_call.1} parent=39 // pred_fallthru
          _
        // Predicated region
        $region49: #{tpu_custom_call.1} parent=39 // pred_check
          %p455 = pneg %p181
        $region50: #{tpu_custom_call.1} parent=39 // pred_check_branch
          %457 = sbr.rel (%p455) target = $region52
        $region51: #{tpu_custom_call.1} parent=39 // pred_region
          %p458 = scmp.lt.s32.totalorder %s25, 1
          %s459 = scalar_select %p458, %s25, 1
          %s460 = smul.addr %s459, 8
          %s461 = smul.addr %s460, 8
          %s462 = scalar_lea.vmem %s6, %s461
        $region52: #{tpu_custom_call.1} parent=39 // pred_fallthru
          _
        // Predicated region
        $region53: #{tpu_custom_call.1} parent=39 // pred_check
          %p463 = pneg %p207
        $region54: #{tpu_custom_call.1} parent=39 // pred_check_branch
          %465 = sbr.rel (%p463) target = $region56
        $region55: #{tpu_custom_call.1} parent=39 // pred_region
          %p466 = scmp.lt.s32.totalorder %s25, 1
          %s467 = scalar_select %p466, %s25, 1
          %s468 = scalar_lea.vmem %s7, %s467
        $region56: #{tpu_custom_call.1} parent=39 // pred_fallthru
          _
        // Predicated region
        $region57: #{tpu_custom_call.1} parent=39 // pred_check
          %p469 = pneg %p233
        $region58: #{tpu_custom_call.1} parent=39 // pred_check_branch
          %471 = sbr.rel (%p469) target = $region60
        $region59: #{tpu_custom_call.1} parent=39 // pred_region
          %s472 = sand.u32 %s25, 1
          %s473 = scalar_lea.sflag [#allocation4], %s472
          %s474 = sand.u32 %s223, 1
          %s475 = smul.addr %s474, 128
          %s476 = scalar_lea.vmem [#allocation11], %s475
          %478 = vsyncadd %s473, 0
          %s479 = smul.addr %s25, 16
          %s480 = smul.addr %s479, 8
          %s481 = scalar_lea.hbm %s8, %s480
          %s482 = sshll.u32 %s481, 4
          %s483 = int_to_ptr.hbm [resolvable:$true] %s482
          %s484 = sshll.u32 %s476, 4
          %s485 = int_to_ptr.vmem [resolvable:$true] %s484
          %490 = dma.hbm_to_vmem [thread:$0]  %s483, 2048, %s485, %s473, 256, 256, 16
        $region60: #{tpu_custom_call.1} parent=39 // pred_fallthru
          _
        // Predicated region
        $region61: #{tpu_custom_call.1} parent=39 // pred_check
          %p491 = pneg %p259
        $region62: #{tpu_custom_call.1} parent=39 // pred_check_branch
          %493 = sbr.rel (%p491) target = $region64
        $region63: #{tpu_custom_call.1} parent=39 // pred_region
          %p494 = scmp.lt.s32.totalorder %s25, 1
          %s495 = scalar_select %p494, %s25, 1
          %s496 = smul.addr %s495, 16
          %s497 = smul.addr %s496, 8
          %s498 = scalar_lea.vmem %s9, %s497
        $region64: #{tpu_custom_call.1} parent=39 // pred_fallthru
          _
      $region40: #{tpu_custom_call.1} parent=5 // pred_fallthru
        _
      %p499 = scmp.le.s32.totalorder 1, %s25
      %p500 = scmp.lt.s32.totalorder %s25, 3
      %p501 = pnand %p499, %p500
      %p502 = pneg %p501
      // Predicated region
      $region65: #{tpu_custom_call.1} parent=5 // pred_check
        _
      $region66: #{tpu_custom_call.1} parent=5 // pred_check_branch
        %504 = sbr.rel (%p501) target = $region68
      $region67: #{tpu_custom_call.1} parent=5 // pred_region
        %s505 = ssub.s32 %s25, 1
        // Predicated region
        $region69: #{tpu_custom_call.1} parent=67 // pred_check
          %p506 = pneg %p46
        $region70: #{tpu_custom_call.1} parent=67 // pred_check_branch
          %508 = sbr.rel (%p506) target = $region72
        $region71: #{tpu_custom_call.1} parent=67 // pred_region
          %510 = dma.done [#allocation4], 256
        $region72: #{tpu_custom_call.1} parent=67 // pred_fallthru
          _
        // Predicated region
        $region73: #{tpu_custom_call.1} parent=67 // pred_check
          %p511 = pneg %p67
        $region74: #{tpu_custom_call.1} parent=67 // pred_check_branch
          %513 = sbr.rel (%p511) target = $region76
        $region75: #{tpu_custom_call.1} parent=67 // pred_region
          %515 = dma.done [#allocation7], 256
        $region76: #{tpu_custom_call.1} parent=67 // pred_fallthru
          _
        // Predicated region
        $region77: #{tpu_custom_call.1} parent=67 // pred_check
          %p516 = pneg %p88
        $region78: #{tpu_custom_call.1} parent=67 // pred_check_branch
          %518 = sbr.rel (%p516) target = $region80
        $region79: #{tpu_custom_call.1} parent=67 // pred_region
          %520 = dma.done [#allocation7], 256
        $region80: #{tpu_custom_call.1} parent=67 // pred_fallthru
          _
        // Predicated region
        $region81: #{tpu_custom_call.1} parent=67 // pred_check
          %p521 = pneg %p109
        $region82: #{tpu_custom_call.1} parent=67 // pred_check_branch
          %523 = sbr.rel (%p521) target = $region84
        $region83: #{tpu_custom_call.1} parent=67 // pred_region
          %525 = dma.done [#allocation10], 256
        $region84: #{tpu_custom_call.1} parent=67 // pred_fallthru
          _
        %s526 = sand.u32 %s30, 1
        %s527 = scalar_lea.sflag [#allocation4], %s526
        %s528 = sand.u32 %s226, 1
        %s529 = smul.addr %s528, 128
        %s530 = scalar_lea.vmem [#allocation11], %s529
        // Predicated region
        $region85: #{tpu_custom_call.1} parent=67 // pred_check
          %p531 = pneg %p239
        $region86: #{tpu_custom_call.1} parent=67 // pred_check_branch
          %533 = sbr.rel (%p531) target = $region88
        $region87: #{tpu_custom_call.1} parent=67 // pred_region
          %535 = dma.done %s527, 2048
        $region88: #{tpu_custom_call.1} parent=67 // pred_fallthru
          _
        // Predicated region
        $region89: #{tpu_custom_call.1} parent=67 // pred_check
          %p536 = pneg %p307
        $region90: #{tpu_custom_call.1} parent=67 // pred_check_branch
          %538 = sbr.rel (%p536) target = $region92
        $region91: #{tpu_custom_call.1} parent=67 // pred_region
          %540 = dma.done [#allocation7], 1024
        $region92: #{tpu_custom_call.1} parent=67 // pred_fallthru
          _
        %p541 = pneg %p46
        %p542 = pneg %p43
        %p543 = pneg %p67
        %p544 = pneg %p64
        %p545 = pneg %p88
        %p546 = pneg %p85
        %p547 = pneg %p109
        %p548 = pneg %p106
        %p549 = scmp.lt.s32.totalorder %s30, 1
        %s550 = scalar_select %p549, %s30, 1
        %s551 = scalar_lea.vmem %s4, %s550
        %p552 = pneg %p135
        %p553 = pneg %p132
        %p554 = scmp.lt.s32.totalorder %s30, 1
        %s555 = scalar_select %p554, %s30, 1
        %s556 = smul.addr %s555, 16
        %s557 = smul.addr %s556, 8
        %s558 = scalar_lea.vmem %s5, %s557
        %p559 = pneg %p161
        %p560 = pneg %p158
        %p561 = scmp.lt.s32.totalorder %s30, 1
        %s562 = scalar_select %p561, %s30, 1
        %s563 = smul.addr %s562, 8
        %s564 = smul.addr %s563, 8
        %s565 = scalar_lea.vmem %s6, %s564
        %p566 = pneg %p187
        %p567 = pneg %p184
        %p568 = scmp.lt.s32.totalorder %s30, 1
        %s569 = scalar_select %p568, %s30, 1
        %s570 = scalar_lea.vmem %s7, %s569
        %p571 = pneg %p213
        %p572 = pneg %p210
        %s573 = sand.u32 %s30, 1
        %s574 = scalar_lea.sflag [#allocation4], %s573
        %s575 = sand.u32 %s226, 1
        %s576 = smul.addr %s575, 128
        %s577 = scalar_lea.vmem [#allocation11], %s576
        %p578 = pneg %p239
        %p579 = pneg %p236
        %p580 = scmp.lt.s32.totalorder %s30, 1
        %s581 = scalar_select %p580, %s30, 1
        %s582 = smul.addr %s581, 16
        %s583 = smul.addr %s582, 8
        %s584 = scalar_lea.vmem %s9, %s583
        %p585 = pneg %p265
        %p586 = pneg %p262
        %p587 = pneg %p286
        %p588 = pneg %p283
        %p589 = pneg %p307
        %p590 = pneg %p304
        %p591 = pneg %p328
        %p592 = pneg %p325
        %p593 = pneg %p349
        %p594 = pneg %p346
        %p595 = scmp.lt.s32.totalorder %s30, 1
        %s596 = scalar_select %p595, %s30, 1
        %s597 = scalar_lea.vmem %s4, %s596
        %p598 = scmp.lt.s32.totalorder %s30, 1
        %s599 = scalar_select %p598, %s30, 1
        %s600 = smul.addr %s599, 16
        %s601 = smul.addr %s600, 8
        %s602 = scalar_lea.vmem %s5, %s601
        %p603 = scmp.lt.s32.totalorder %s30, 1
        %s604 = scalar_select %p603, %s30, 1
        %s605 = smul.addr %s604, 8
        %s606 = smul.addr %s605, 8
        %s607 = scalar_lea.vmem %s6, %s606
        %p608 = scmp.lt.s32.totalorder %s30, 1
        %s609 = scalar_select %p608, %s30, 1
        %s610 = scalar_lea.vmem %s7, %s609
        %p611 = scmp.lt.s32.totalorder %s30, 1
        %s612 = scalar_select %p611, %s30, 1
        %s613 = smul.addr %s612, 16
        %s614 = smul.addr %s613, 8
        %s615 = scalar_lea.vmem %s9, %s614
        %p616 = scmp.eq.s32.totalorder %s30, 0
        // Predicated region
        $region93: #{tpu_custom_call.1} parent=67 // pred_check
          %p617 = pneg %p616
        $region94: #{tpu_custom_call.1} parent=67 // pred_check_branch
          %619 = sbr.rel (%p617) target = $region96
        $region95: #{tpu_custom_call.1} parent=67 // pred_region
          %v620 = vld [vmem:[#allocation3] sm:$0xff]
          %v621 = vld [vmem:[#allocation3 + $0x8] sm:$0xff]
          %v622 = vmul.f32 %v620, 8.0
          %v623 = vmul.f32 %v621, 8.0
          %vm624 = vcmask 523264
          %625 = vst.msk [vmem:[#allocation2] sm:$0xff] %vm624, %v622
          %626 = vst.msk [vmem:[#allocation2 + $0x8] sm:$0xff] %vm624, %v623
        $region96: #{tpu_custom_call.1} parent=67 // pred_fallthru
          _
        %v627 = vld [vmem:[#allocation2] sm:$0xff]
        %v628 = vld [vmem:[#allocation2 + $0x8] sm:$0xff]
        %v629 = vld [vmem:[#allocation8] sm:$0xff]
        %v630 = vld [vmem:[#allocation8 + $0x8] sm:$0xff]
        %v631 = vld [vmem:[#allocation9] sm:$0xff]
        %v632 = vld [vmem:[#allocation9 + $0x8] sm:$0xff]
        %v633 = vld [vmem:[#allocation6] sm:$0xff]
        %v634 = vld [vmem:[#allocation6 + $0x8] sm:$0xff]
        %v635 = vld [vmem:[%s597] sm:$0x1]
        %v636 = vmul.f32 %v627, %v627
        %v637 = vmul.f32 %v628, %v628
        %vm638 = vcmask 523264
        %v639 = vsel %vm638, %v636, 0.0
        %640 = vadd.xlane.f32.xlu0 %v639
        %v641 = vpop.xlane.xlu0 %640
        %v642 = vsel %vm638, %v637, 0.0
        %643 = vadd.xlane.f32.xlu0 %v642
        %v644 = vpop.xlane.xlu0 %643
        %v645 = vrcp.pop 64.0
        %v646 = vmul.f32 64.0, %v645
        %v647 = vsub.f32 1.0, %v646
        %v648 = vmul.f32 %v645, %v647
        %v649 = vadd.f32 %v645, %v648
        %vm650 = vweird.f32 %v645
        %v651 = vsel %vm650, %v645, %v649
        %v652 = vmul.f32 %v641, %v651
        %v653 = vmul.f32 %v644, %v651
        %v654 = vadd.f32 %v652, 1e-06
        %v655 = vadd.f32 %v653, 1e-06
        %v656 = vrsqrt.pop %v654
        %v657 = vmul.f32 %v656, %v654
        %v658 = vmul.f32 %v657, %v656
        %v659 = vmul.f32 0.5, %v658
        %v660 = vsub.f32 1.5, %v659
        %v661 = vmul.f32 %v656, %v660
        %vm662 = vweird.f32 %v654
        %vm663 = vweird.f32 %v656
        %vm664 = vmor %vm662, %vm663
        %v665 = vsel %vm664, %v656, %v661
        %v666 = vrsqrt.pop %v655
        %v667 = vmul.f32 %v666, %v655
        %v668 = vmul.f32 %v667, %v666
        %v669 = vmul.f32 0.5, %v668
        %v670 = vsub.f32 1.5, %v669
        %v671 = vmul.f32 %v666, %v670
        %vm672 = vweird.f32 %v655
        %vm673 = vweird.f32 %v666
        %vm674 = vmor %vm672, %vm673
        %v675 = vsel %vm674, %v666, %v671
        %v676 = vmul.f32 %v627, %v665
        %v677 = vmul.f32 %v628, %v675
        %v678 = vadd.f32 %v635, 1.0
        %v680 = vperm.slane %v678, 0
        %v682 = vmul.f32 %v676, %v680
        %v683 = vmul.f32 %v677, %v680
        %v684 = vld [vmem:[%s602] sm:$0xff]
        %v685 = vld [vmem:[%s602 + $0x8] sm:$0xff]
        %v686 = vld [vmem:[%s602 + $0x10] sm:$0xff]
        %v687 = vld [vmem:[%s602 + $0x18] sm:$0xff]
        %v688 = vld [vmem:[%s602 + $0x20] sm:$0xff]
        %v689 = vld [vmem:[%s602 + $0x28] sm:$0xff]
        %v690 = vld [vmem:[%s602 + $0x30] sm:$0xff]
        %v691 = vld [vmem:[%s602 + $0x38] sm:$0xff]
        %v692 = vld [vmem:[%s602 + $0x40] sm:$0xff]
        %v693 = vld [vmem:[%s602 + $0x48] sm:$0xff]
        %v694 = vld [vmem:[%s602 + $0x50] sm:$0xff]
        %v695 = vld [vmem:[%s602 + $0x58] sm:$0xff]
        %v696 = vld [vmem:[%s602 + $0x60] sm:$0xff]
        %v697 = vld [vmem:[%s602 + $0x68] sm:$0xff]
        %v698 = vld [vmem:[%s602 + $0x70] sm:$0xff]
        %v699 = vld [vmem:[%s602 + $0x78] sm:$0xff]
        %v701 = vsel %vm638, %v682, 0
        %v704 = vsel %vm638, %v683, 0
        %706 = vmatpush.msra.mxu0 0.0
        %707 = vmatpush.msra.mxu0 0.0
        %708 = vmatpush.msra.mxu0 0.0
        %709 = vmatpush.msra.mxu0 0.0
        %710 = vmatpush.msra.mxu0 0.0
        %711 = vmatpush.msra.mxu0 0.0
        %712 = vmatpush.msra.mxu0 0.0
        %713 = vmatpush.msra.mxu0 0.0
        %714 = vmatpush.msra.mxu0 %v698
        %715 = vmatpush.msra.mxu0 %v696
        %716 = vmatpush.msra.mxu0 %v694
        %717 = vmatpush.msra.mxu0 %v692
        %718 = vmatpush.msra.mxu0 %v690
        %719 = vmatpush.msra.mxu0 %v688
        %720 = vmatpush.msra.mxu0 %v686
        %721 = vmatpush.msra.mxu0 %v684
        %722 = vmatmul.f32.gmra.mxu0 %v701
        %v723 = vpop.f32.mrf.mxu0
        %v724 = vadd.f32 0.0, %v723
        %725 = vmatmul.f32.gmra.mxu0 %v704
        %v726 = vpop.f32.mrf.mxu0
        %v727 = vadd.f32 0.0, %v726
        %728 = vdwg.mxu0
        %729 = vmatpush.msra.mxu0 0.0
        %730 = vmatpush.msra.mxu0 0.0
        %731 = vmatpush.msra.mxu0 0.0
        %732 = vmatpush.msra.mxu0 0.0
        %733 = vmatpush.msra.mxu0 0.0
        %734 = vmatpush.msra.mxu0 0.0
        %735 = vmatpush.msra.mxu0 0.0
        %736 = vmatpush.msra.mxu0 0.0
        %737 = vmatpush.msra.mxu0 %v699
        %738 = vmatpush.msra.mxu0 %v697
        %739 = vmatpush.msra.mxu0 %v695
        %740 = vmatpush.msra.mxu0 %v693
        %741 = vmatpush.msra.mxu0 %v691
        %742 = vmatpush.msra.mxu0 %v689
        %743 = vmatpush.msra.mxu0 %v687
        %744 = vmatpush.msra.mxu0 %v685
        %745 = vmatmul.f32.gmra.mxu0 %v701
        %v746 = vpop.f32.mrf.mxu0
        %v747 = vadd.f32 0.0, %v746
        %748 = vmatmul.f32.gmra.mxu0 %v704
        %v749 = vpop.f32.mrf.mxu0
        %v750 = vadd.f32 0.0, %v749
        %751 = vdwg.mxu0
        %v752 = vmul.f32 %v724, %v629
        %v753 = vmul.f32 %v727, %v630
        %756 = vrot.lane.b32.xlu0 %v631, 64
        %v757 = vpop.permute.xlu0 %756
        %758 = vrot.lane.b32.xlu0 %v632, 64
        %v759 = vpop.permute.xlu0 %758
        %v762 = vmul.f32 %v724, %v757
        %v763 = vmul.f32 %v727, %v759
        %766 = vrot.lane.b32.xlu0 %v762, 64
        %v767 = vpop.permute.xlu0 %766
        %768 = vrot.lane.b32.xlu0 %v763, 64
        %v769 = vpop.permute.xlu0 %768
        %v772 = vadd.f32 %v752, %v767
        %v773 = vadd.f32 %v753, %v769
        %v774 = vmul.f32 %v747, %v629
        %v775 = vmul.f32 %v750, %v630
        %776 = vrot.lane.b32.xlu0 %v631, 32
        %v777 = vpop.permute.xlu0 %776
        %778 = vrot.lane.b32.xlu0 %v632, 32
        %v779 = vpop.permute.xlu0 %778
        %v782 = vmul.f32 %v747, %v777
        %v783 = vmul.f32 %v750, %v779
        %786 = vrot.lane.b32.xlu0 %v782, 96
        %v787 = vpop.permute.xlu0 %786
        %788 = vrot.lane.b32.xlu0 %v783, 96
        %v789 = vpop.permute.xlu0 %788
        %v792 = vadd.f32 %v774, %v787
        %v793 = vadd.f32 %v775, %v789
        %vm794 = vcmask 130048
        %v796 = vsel %vm794, %v772, 0
        %v799 = vsel %vm794, %v792, 0
        %801 = vmatpush.xpose.msra.mxu0 0.0
        %802 = vmatpush.xpose.msra.mxu0 0.0
        %803 = vmatpush.xpose.msra.mxu0 0.0
        %804 = vmatpush.xpose.msra.mxu0 0.0
        %805 = vmatpush.xpose.msra.mxu0 0.0
        %806 = vmatpush.xpose.msra.mxu0 0.0
        %807 = vmatpush.xpose.msra.mxu0 0.0
        %808 = vmatpush.xpose.msra.mxu0 0.0
        %809 = vmatpush.xpose.msra.mxu0 0.0
        %810 = vmatpush.xpose.msra.mxu0 0.0
        %811 = vmatpush.xpose.msra.mxu0 0.0
        %812 = vmatpush.xpose.msra.mxu0 0.0
        %813 = vmatpush.xpose.msra.mxu0 0.0
        %814 = vmatpush.xpose.msra.mxu0 0.0
        %815 = vmatpush.xpose.msra.mxu0 0.0
        %816 = vmatpush.xpose.msra.mxu0 %v799
        %817 = vmatmul.f32.gmra.mxu0 %v796
        %v818 = vpop.f32.mrf.mxu0
        %v819 = vadd.f32 0.0, %v818
        %820 = vdwg.mxu0
        %v822 = vsel %vm794, %v773, 0
        %v825 = vsel %vm794, %v793, 0
        %827 = vmatpush.xpose.msra.mxu0 0.0
        %828 = vmatpush.xpose.msra.mxu0 0.0
        %829 = vmatpush.xpose.msra.mxu0 0.0
        %830 = vmatpush.xpose.msra.mxu0 0.0
        %831 = vmatpush.xpose.msra.mxu0 0.0
        %832 = vmatpush.xpose.msra.mxu0 0.0
        %833 = vmatpush.xpose.msra.mxu0 0.0
        %834 = vmatpush.xpose.msra.mxu0 0.0
        %835 = vmatpush.xpose.msra.mxu0 0.0
        %836 = vmatpush.xpose.msra.mxu0 0.0
        %837 = vmatpush.xpose.msra.mxu0 0.0
        %838 = vmatpush.xpose.msra.mxu0 0.0
        %839 = vmatpush.xpose.msra.mxu0 0.0
        %840 = vmatpush.xpose.msra.mxu0 0.0
        %841 = vmatpush.xpose.msra.mxu0 0.0
        %842 = vmatpush.xpose.msra.mxu0 %v825
        %843 = vmatmul.f32.gmra.mxu0 %v822
        %v844 = vpop.f32.mrf.mxu0
        %v845 = vadd.f32 0.0, %v844
        %846 = vdwg.mxu0
        %v847 = vmul.f32 %v819, 0.25
        %v848 = vmul.f32 %v845, 0.25
        %v849 = vadd.f32 %v847, %v633
        %v850 = vadd.f32 %v848, %v634
        %vm851 = vcmask 64512
        %v852 = vsel %vm851, %v849, -inf
        %853 = vmax.xlane.f32.xlu0 %v852
        %v854 = vpop.xlane.xlu0 %853
        %v855 = vsel %vm851, %v850, -inf
        %856 = vmax.xlane.f32.xlu0 %v855
        %v857 = vpop.xlane.xlu0 %856
        %v858 = vsub.f32 %v849, %v854
        %v859 = vsub.f32 %v850, %v857
        %v860 = vmul.f32 %v858, 1.442695
        %v861 = vpow.pop %v860
        %v862 = vmul.f32 %v859, 1.442695
        %v863 = vpow.pop %v862
        %v864 = vsel %vm851, %v861, 0.0
        %865 = vadd.xlane.f32.xlu0 %v864
        %v866 = vpop.xlane.xlu0 %865
        %v867 = vsel %vm851, %v863, 0.0
        %868 = vadd.xlane.f32.xlu0 %v867
        %v869 = vpop.xlane.xlu0 %868
        %v870 = vrcp.pop %v866
        %v871 = vrcp.pop %v869
        %v872 = vmul.f32 %v861, %v870
        %v873 = vmul.f32 %v863, %v871
        %875 = vrot.lane.b32.xlu0 %v747, 64
        %v876 = vpop.permute.xlu0 %875
        %v879 = vsel %vm851, %v872, 0
        %881 = vmatpush.msra.mxu0 0.0
        %882 = vmatpush.msra.mxu0 0.0
        %883 = vmatpush.msra.mxu0 0.0
        %884 = vmatpush.msra.mxu0 0.0
        %885 = vmatpush.msra.mxu0 0.0
        %886 = vmatpush.msra.mxu0 0.0
        %887 = vmatpush.msra.mxu0 0.0
        %888 = vmatpush.msra.mxu0 0.0
        %889 = vmatpush.msra.mxu0 0.0
        %890 = vmatpush.msra.mxu0 0.0
        %891 = vmatpush.msra.mxu0 0.0
        %892 = vmatpush.msra.mxu0 0.0
        %893 = vmatpush.msra.mxu0 0.0
        %894 = vmatpush.msra.mxu0 0.0
        %895 = vmatpush.msra.mxu0 0.0
        %896 = vmatpush.msra.mxu0 %v876
        %897 = vmatmul.f32.gmra.mxu0 %v879
        %v898 = vpop.f32.mrf.mxu0
        %v899 = vadd.f32 0.0, %v898
        %900 = vdwg.mxu0
        %902 = vrot.lane.b32.xlu0 %v750, 64
        %v903 = vpop.permute.xlu0 %902
        %v906 = vsel %vm851, %v873, 0
        %908 = vmatpush.msra.mxu0 0.0
        %909 = vmatpush.msra.mxu0 0.0
        %910 = vmatpush.msra.mxu0 0.0
        %911 = vmatpush.msra.mxu0 0.0
        %912 = vmatpush.msra.mxu0 0.0
        %913 = vmatpush.msra.mxu0 0.0
        %914 = vmatpush.msra.mxu0 0.0
        %915 = vmatpush.msra.mxu0 0.0
        %916 = vmatpush.msra.mxu0 0.0
        %917 = vmatpush.msra.mxu0 0.0
        %918 = vmatpush.msra.mxu0 0.0
        %919 = vmatpush.msra.mxu0 0.0
        %920 = vmatpush.msra.mxu0 0.0
        %921 = vmatpush.msra.mxu0 0.0
        %922 = vmatpush.msra.mxu0 0.0
        %923 = vmatpush.msra.mxu0 %v903
        %924 = vmatmul.f32.gmra.mxu0 %v906
        %v925 = vpop.f32.mrf.mxu0
        %v926 = vadd.f32 0.0, %v925
        %927 = vdwg.mxu0
        %928 = vrot.lane.b32.xlu0 %v772, 112
        %v929 = vpop.permute.xlu0 %928
        %v930 = vsel %vm794, %v929, 0
        %932 = vmatpush.xpose.msra.mxu0 0.0
        %933 = vmatpush.xpose.msra.mxu0 0.0
        %934 = vmatpush.xpose.msra.mxu0 0.0
        %935 = vmatpush.xpose.msra.mxu0 0.0
        %936 = vmatpush.xpose.msra.mxu0 0.0
        %937 = vmatpush.xpose.msra.mxu0 0.0
        %938 = vmatpush.xpose.msra.mxu0 0.0
        %939 = vmatpush.xpose.msra.mxu0 0.0
        %940 = vmatpush.xpose.msra.mxu0 0.0
        %941 = vmatpush.xpose.msra.mxu0 0.0
        %942 = vmatpush.xpose.msra.mxu0 0.0
        %943 = vmatpush.xpose.msra.mxu0 0.0
        %944 = vmatpush.xpose.msra.mxu0 0.0
        %945 = vmatpush.xpose.msra.mxu0 0.0
        %946 = vmatpush.xpose.msra.mxu0 0.0
        %947 = vmatpush.xpose.msra.mxu0 %v799
        %948 = vmatmul.f32.gmra.mxu0 %v930
        %v949 = vpop.f32.mrf.mxu0
        %v950 = vadd.f32 0.0, %v949
        %951 = vdwg.mxu0
        %952 = vrot.lane.b32.xlu0 %v773, 112
        %v953 = vpop.permute.xlu0 %952
        %v954 = vsel %vm794, %v953, 0
        %956 = vmatpush.xpose.msra.mxu0 0.0
        %957 = vmatpush.xpose.msra.mxu0 0.0
        %958 = vmatpush.xpose.msra.mxu0 0.0
        %959 = vmatpush.xpose.msra.mxu0 0.0
        %960 = vmatpush.xpose.msra.mxu0 0.0
        %961 = vmatpush.xpose.msra.mxu0 0.0
        %962 = vmatpush.xpose.msra.mxu0 0.0
        %963 = vmatpush.xpose.msra.mxu0 0.0
        %964 = vmatpush.xpose.msra.mxu0 0.0
        %965 = vmatpush.xpose.msra.mxu0 0.0
        %966 = vmatpush.xpose.msra.mxu0 0.0
        %967 = vmatpush.xpose.msra.mxu0 0.0
        %968 = vmatpush.xpose.msra.mxu0 0.0
        %969 = vmatpush.xpose.msra.mxu0 0.0
        %970 = vmatpush.xpose.msra.mxu0 0.0
        %971 = vmatpush.xpose.msra.mxu0 %v825
        %972 = vmatmul.f32.gmra.mxu0 %v954
        %v973 = vpop.f32.mrf.mxu0
        %v974 = vadd.f32 0.0, %v973
        %975 = vdwg.mxu0
        %v976 = vmul.f32 %v950, 0.25
        %v977 = vmul.f32 %v974, 0.25
        %v978 = vadd.f32 %v976, %v633
        %v979 = vadd.f32 %v977, %v634
        %v980 = vsel %vm851, %v978, -inf
        %981 = vmax.xlane.f32.xlu0 %v980
        %v982 = vpop.xlane.xlu0 %981
        %v983 = vsel %vm851, %v979, -inf
        %984 = vmax.xlane.f32.xlu0 %v983
        %v985 = vpop.xlane.xlu0 %984
        %v986 = vsub.f32 %v978, %v982
        %v987 = vsub.f32 %v979, %v985
        %v988 = vmul.f32 %v986, 1.442695
        %v989 = vpow.pop %v988
        %v990 = vmul.f32 %v987, 1.442695
        %v991 = vpow.pop %v990
        %v992 = vsel %vm851, %v989, 0.0
        %993 = vadd.xlane.f32.xlu0 %v992
        %v994 = vpop.xlane.xlu0 %993
        %v995 = vsel %vm851, %v991, 0.0
        %996 = vadd.xlane.f32.xlu0 %v995
        %v997 = vpop.xlane.xlu0 %996
        %v998 = vrcp.pop %v994
        %v999 = vrcp.pop %v997
        %v1000 = vmul.f32 %v989, %v998
        %v1001 = vmul.f32 %v991, %v999
        %v1003 = vsel %vm851, %v1000, 0
        %1005 = vmatpush.msra.mxu0 0.0
        %1006 = vmatpush.msra.mxu0 0.0
        %1007 = vmatpush.msra.mxu0 0.0
        %1008 = vmatpush.msra.mxu0 0.0
        %1009 = vmatpush.msra.mxu0 0.0
        %1010 = vmatpush.msra.mxu0 0.0
        %1011 = vmatpush.msra.mxu0 0.0
        %1012 = vmatpush.msra.mxu0 0.0
        %1013 = vmatpush.msra.mxu0 0.0
        %1014 = vmatpush.msra.mxu0 0.0
        %1015 = vmatpush.msra.mxu0 0.0
        %1016 = vmatpush.msra.mxu0 0.0
        %1017 = vmatpush.msra.mxu0 0.0
        %1018 = vmatpush.msra.mxu0 0.0
        %1019 = vmatpush.msra.mxu0 0.0
        %1020 = vmatpush.msra.mxu0 %v876
        %1021 = vmatmul.f32.gmra.mxu0 %v1003
        %v1022 = vpop.f32.mrf.mxu0
        %v1023 = vadd.f32 0.0, %v1022
        %1024 = vdwg.mxu0
        %v1026 = vsel %vm851, %v1001, 0
        %1028 = vmatpush.msra.mxu0 0.0
        %1029 = vmatpush.msra.mxu0 0.0
        %1030 = vmatpush.msra.mxu0 0.0
        %1031 = vmatpush.msra.mxu0 0.0
        %1032 = vmatpush.msra.mxu0 0.0
        %1033 = vmatpush.msra.mxu0 0.0
        %1034 = vmatpush.msra.mxu0 0.0
        %1035 = vmatpush.msra.mxu0 0.0
        %1036 = vmatpush.msra.mxu0 0.0
        %1037 = vmatpush.msra.mxu0 0.0
        %1038 = vmatpush.msra.mxu0 0.0
        %1039 = vmatpush.msra.mxu0 0.0
        %1040 = vmatpush.msra.mxu0 0.0
        %1041 = vmatpush.msra.mxu0 0.0
        %1042 = vmatpush.msra.mxu0 0.0
        %1043 = vmatpush.msra.mxu0 %v903
        %1044 = vmatmul.f32.gmra.mxu0 %v1026
        %v1045 = vpop.f32.mrf.mxu0
        %v1046 = vadd.f32 0.0, %v1045
        %1047 = vdwg.mxu0
        %1048 = vrot.lane.b32.xlu0 %v772, 96
        %v1049 = vpop.permute.xlu0 %1048
        %1050 = vrot.lane.b32.xlu0 %v792, 112
        %v1051 = vpop.permute.xlu0 %1050
        %v1052 = vsel %vm794, %v1049, 0
        %v1054 = vsel %vm794, %v1051, 0
        %1056 = vmatpush.xpose.msra.mxu0 0.0
        %1057 = vmatpush.xpose.msra.mxu0 0.0
        %1058 = vmatpush.xpose.msra.mxu0 0.0
        %1059 = vmatpush.xpose.msra.mxu0 0.0
        %1060 = vmatpush.xpose.msra.mxu0 0.0
        %1061 = vmatpush.xpose.msra.mxu0 0.0
        %1062 = vmatpush.xpose.msra.mxu0 0.0
        %1063 = vmatpush.xpose.msra.mxu0 0.0
        %1064 = vmatpush.xpose.msra.mxu0 0.0
        %1065 = vmatpush.xpose.msra.mxu0 0.0
        %1066 = vmatpush.xpose.msra.mxu0 0.0
        %1067 = vmatpush.xpose.msra.mxu0 0.0
        %1068 = vmatpush.xpose.msra.mxu0 0.0
        %1069 = vmatpush.xpose.msra.mxu0 0.0
        %1070 = vmatpush.xpose.msra.mxu0 0.0
        %1071 = vmatpush.xpose.msra.mxu0 %v1054
        %1072 = vmatmul.f32.gmra.mxu0 %v1052
        %v1073 = vpop.f32.mrf.mxu0
        %v1074 = vadd.f32 0.0, %v1073
        %1075 = vdwg.mxu0
        %1076 = vrot.lane.b32.xlu0 %v773, 96
        %v1077 = vpop.permute.xlu0 %1076
        %1078 = vrot.lane.b32.xlu0 %v793, 112
        %v1079 = vpop.permute.xlu0 %1078
        %v1080 = vsel %vm794, %v1077, 0
        %v1082 = vsel %vm794, %v1079, 0
        %1084 = vmatpush.xpose.msra.mxu0 0.0
        %1085 = vmatpush.xpose.msra.mxu0 0.0
        %1086 = vmatpush.xpose.msra.mxu0 0.0
        %1087 = vmatpush.xpose.msra.mxu0 0.0
        %1088 = vmatpush.xpose.msra.mxu0 0.0
        %1089 = vmatpush.xpose.msra.mxu0 0.0
        %1090 = vmatpush.xpose.msra.mxu0 0.0
        %1091 = vmatpush.xpose.msra.mxu0 0.0
        %1092 = vmatpush.xpose.msra.mxu0 0.0
        %1093 = vmatpush.xpose.msra.mxu0 0.0
        %1094 = vmatpush.xpose.msra.mxu0 0.0
        %1095 = vmatpush.xpose.msra.mxu0 0.0
        %1096 = vmatpush.xpose.msra.mxu0 0.0
        %1097 = vmatpush.xpose.msra.mxu0 0.0
        %1098 = vmatpush.xpose.msra.mxu0 0.0
        %1099 = vmatpush.xpose.msra.mxu0 %v1082
        %1100 = vmatmul.f32.gmra.mxu0 %v1080
        %v1101 = vpop.f32.mrf.mxu0
        %v1102 = vadd.f32 0.0, %v1101
        %1103 = vdwg.mxu0
        %v1104 = vmul.f32 %v1074, 0.25
        %v1105 = vmul.f32 %v1102, 0.25
        %v1106 = vadd.f32 %v1104, %v633
        %v1107 = vadd.f32 %v1105, %v634
        %v1108 = vsel %vm851, %v1106, -inf
        %1109 = vmax.xlane.f32.xlu0 %v1108
        %v1110 = vpop.xlane.xlu0 %1109
        %v1111 = vsel %vm851, %v1107, -inf
        %1112 = vmax.xlane.f32.xlu0 %v1111
        %v1113 = vpop.xlane.xlu0 %1112
        %v1114 = vsub.f32 %v1106, %v1110
        %v1115 = vsub.f32 %v1107, %v1113
        %v1116 = vmul.f32 %v1114, 1.442695
        %v1117 = vpow.pop %v1116
        %v1118 = vmul.f32 %v1115, 1.442695
        %v1119 = vpow.pop %v1118
        %v1120 = vsel %vm851, %v1117, 0.0
        %1121 = vadd.xlane.f32.xlu0 %v1120
        %v1122 = vpop.xlane.xlu0 %1121
        %v1123 = vsel %vm851, %v1119, 0.0
        %1124 = vadd.xlane.f32.xlu0 %v1123
        %v1125 = vpop.xlane.xlu0 %1124
        %v1126 = vrcp.pop %v1122
        %v1127 = vrcp.pop %v1125
        %v1128 = vmul.f32 %v1117, %v1126
        %v1129 = vmul.f32 %v1119, %v1127
        %1130 = vrot.lane.b32.xlu0 %v747, 48
        %v1131 = vpop.permute.xlu0 %1130
        %v1134 = vsel %vm851, %v1128, 0
        %1136 = vmatpush.msra.mxu0 0.0
        %1137 = vmatpush.msra.mxu0 0.0
        %1138 = vmatpush.msra.mxu0 0.0
        %1139 = vmatpush.msra.mxu0 0.0
        %1140 = vmatpush.msra.mxu0 0.0
        %1141 = vmatpush.msra.mxu0 0.0
        %1142 = vmatpush.msra.mxu0 0.0
        %1143 = vmatpush.msra.mxu0 0.0
        %1144 = vmatpush.msra.mxu0 0.0
        %1145 = vmatpush.msra.mxu0 0.0
        %1146 = vmatpush.msra.mxu0 0.0
        %1147 = vmatpush.msra.mxu0 0.0
        %1148 = vmatpush.msra.mxu0 0.0
        %1149 = vmatpush.msra.mxu0 0.0
        %1150 = vmatpush.msra.mxu0 0.0
        %1151 = vmatpush.msra.mxu0 %v1131
        %1152 = vmatmul.f32.gmra.mxu0 %v1134
        %v1153 = vpop.f32.mrf.mxu0
        %v1154 = vadd.f32 0.0, %v1153
        %1155 = vdwg.mxu0
        %1156 = vrot.lane.b32.xlu0 %v750, 48
        %v1157 = vpop.permute.xlu0 %1156
        %v1160 = vsel %vm851, %v1129, 0
        %1162 = vmatpush.msra.mxu0 0.0
        %1163 = vmatpush.msra.mxu0 0.0
        %1164 = vmatpush.msra.mxu0 0.0
        %1165 = vmatpush.msra.mxu0 0.0
        %1166 = vmatpush.msra.mxu0 0.0
        %1167 = vmatpush.msra.mxu0 0.0
        %1168 = vmatpush.msra.mxu0 0.0
        %1169 = vmatpush.msra.mxu0 0.0
        %1170 = vmatpush.msra.mxu0 0.0
        %1171 = vmatpush.msra.mxu0 0.0
        %1172 = vmatpush.msra.mxu0 0.0
        %1173 = vmatpush.msra.mxu0 0.0
        %1174 = vmatpush.msra.mxu0 0.0
        %1175 = vmatpush.msra.mxu0 0.0
        %1176 = vmatpush.msra.mxu0 0.0
        %1177 = vmatpush.msra.mxu0 %v1157
        %1178 = vmatmul.f32.gmra.mxu0 %v1160
        %v1179 = vpop.f32.mrf.mxu0
        %v1180 = vadd.f32 0.0, %v1179
        %1181 = vdwg.mxu0
        %1182 = vrot.lane.b32.xlu0 %v772, 80
        %v1183 = vpop.permute.xlu0 %1182
        %v1184 = vsel %vm794, %v1183, 0
        %1186 = vmatpush.xpose.msra.mxu0 0.0
        %1187 = vmatpush.xpose.msra.mxu0 0.0
        %1188 = vmatpush.xpose.msra.mxu0 0.0
        %1189 = vmatpush.xpose.msra.mxu0 0.0
        %1190 = vmatpush.xpose.msra.mxu0 0.0
        %1191 = vmatpush.xpose.msra.mxu0 0.0
        %1192 = vmatpush.xpose.msra.mxu0 0.0
        %1193 = vmatpush.xpose.msra.mxu0 0.0
        %1194 = vmatpush.xpose.msra.mxu0 0.0
        %1195 = vmatpush.xpose.msra.mxu0 0.0
        %1196 = vmatpush.xpose.msra.mxu0 0.0
        %1197 = vmatpush.xpose.msra.mxu0 0.0
        %1198 = vmatpush.xpose.msra.mxu0 0.0
        %1199 = vmatpush.xpose.msra.mxu0 0.0
        %1200 = vmatpush.xpose.msra.mxu0 0.0
        %1201 = vmatpush.xpose.msra.mxu0 %v1054
        %1202 = vmatmul.f32.gmra.mxu0 %v1184
        %v1203 = vpop.f32.mrf.mxu0
        %v1204 = vadd.f32 0.0, %v1203
        %1205 = vdwg.mxu0
        %1206 = vrot.lane.b32.xlu0 %v773, 80
        %v1207 = vpop.permute.xlu0 %1206
        %v1208 = vsel %vm794, %v1207, 0
        %1210 = vmatpush.xpose.msra.mxu0 0.0
        %1211 = vmatpush.xpose.msra.mxu0 0.0
        %1212 = vmatpush.xpose.msra.mxu0 0.0
        %1213 = vmatpush.xpose.msra.mxu0 0.0
        %1214 = vmatpush.xpose.msra.mxu0 0.0
        %1215 = vmatpush.xpose.msra.mxu0 0.0
        %1216 = vmatpush.xpose.msra.mxu0 0.0
        %1217 = vmatpush.xpose.msra.mxu0 0.0
        %1218 = vmatpush.xpose.msra.mxu0 0.0
        %1219 = vmatpush.xpose.msra.mxu0 0.0
        %1220 = vmatpush.xpose.msra.mxu0 0.0
        %1221 = vmatpush.xpose.msra.mxu0 0.0
        %1222 = vmatpush.xpose.msra.mxu0 0.0
        %1223 = vmatpush.xpose.msra.mxu0 0.0
        %1224 = vmatpush.xpose.msra.mxu0 0.0
        %1225 = vmatpush.xpose.msra.mxu0 %v1082
        %1226 = vmatmul.f32.gmra.mxu0 %v1208
        %v1227 = vpop.f32.mrf.mxu0
        %v1228 = vadd.f32 0.0, %v1227
        %1229 = vdwg.mxu0
        %v1230 = vmul.f32 %v1204, 0.25
        %v1231 = vmul.f32 %v1228, 0.25
        %v1232 = vadd.f32 %v1230, %v633
        %v1233 = vadd.f32 %v1231, %v634
        %v1234 = vsel %vm851, %v1232, -inf
        %1235 = vmax.xlane.f32.xlu0 %v1234
        %v1236 = vpop.xlane.xlu0 %1235
        %v1237 = vsel %vm851, %v1233, -inf
        %1238 = vmax.xlane.f32.xlu0 %v1237
        %v1239 = vpop.xlane.xlu0 %1238
        %v1240 = vsub.f32 %v1232, %v1236
        %v1241 = vsub.f32 %v1233, %v1239
        %v1242 = vmul.f32 %v1240, 1.442695
        %v1243 = vpow.pop %v1242
        %v1244 = vmul.f32 %v1241, 1.442695
        %v1245 = vpow.pop %v1244
        %v1246 = vsel %vm851, %v1243, 0.0
        %1247 = vadd.xlane.f32.xlu0 %v1246
        %v1248 = vpop.xlane.xlu0 %1247
        %v1249 = vsel %vm851, %v1245, 0.0
        %1250 = vadd.xlane.f32.xlu0 %v1249
        %v1251 = vpop.xlane.xlu0 %1250
        %v1252 = vrcp.pop %v1248
        %v1253 = vrcp.pop %v1251
        %v1254 = vmul.f32 %v1243, %v1252
        %v1255 = vmul.f32 %v1245, %v1253
        %v1257 = vsel %vm851, %v1254, 0
        %1259 = vmatpush.msra.mxu0 0.0
        %1260 = vmatpush.msra.mxu0 0.0
        %1261 = vmatpush.msra.mxu0 0.0
        %1262 = vmatpush.msra.mxu0 0.0
        %1263 = vmatpush.msra.mxu0 0.0
        %1264 = vmatpush.msra.mxu0 0.0
        %1265 = vmatpush.msra.mxu0 0.0
        %1266 = vmatpush.msra.mxu0 0.0
        %1267 = vmatpush.msra.mxu0 0.0
        %1268 = vmatpush.msra.mxu0 0.0
        %1269 = vmatpush.msra.mxu0 0.0
        %1270 = vmatpush.msra.mxu0 0.0
        %1271 = vmatpush.msra.mxu0 0.0
        %1272 = vmatpush.msra.mxu0 0.0
        %1273 = vmatpush.msra.mxu0 0.0
        %1274 = vmatpush.msra.mxu0 %v1131
        %1275 = vmatmul.f32.gmra.mxu0 %v1257
        %v1276 = vpop.f32.mrf.mxu0
        %v1277 = vadd.f32 0.0, %v1276
        %1278 = vdwg.mxu0
        %v1280 = vsel %vm851, %v1255, 0
        %1282 = vmatpush.msra.mxu0 0.0
        %1283 = vmatpush.msra.mxu0 0.0
        %1284 = vmatpush.msra.mxu0 0.0
        %1285 = vmatpush.msra.mxu0 0.0
        %1286 = vmatpush.msra.mxu0 0.0
        %1287 = vmatpush.msra.mxu0 0.0
        %1288 = vmatpush.msra.mxu0 0.0
        %1289 = vmatpush.msra.mxu0 0.0
        %1290 = vmatpush.msra.mxu0 0.0
        %1291 = vmatpush.msra.mxu0 0.0
        %1292 = vmatpush.msra.mxu0 0.0
        %1293 = vmatpush.msra.mxu0 0.0
        %1294 = vmatpush.msra.mxu0 0.0
        %1295 = vmatpush.msra.mxu0 0.0
        %1296 = vmatpush.msra.mxu0 0.0
        %1297 = vmatpush.msra.mxu0 %v1157
        %1298 = vmatmul.f32.gmra.mxu0 %v1280
        %v1299 = vpop.f32.mrf.mxu0
        %v1300 = vadd.f32 0.0, %v1299
        %1301 = vdwg.mxu0
        %1304 = vrot.lane.b32.xlu0 %v1023, 16
        %v1305 = vpop.permute.xlu0 %1304
        %1306 = vrot.lane.b32.xlu0 %v1046, 16
        %v1307 = vpop.permute.xlu0 %1306
        %1312 = vrot.lane.b32.xlu0 %v1154, 32
        %v1313 = vpop.permute.xlu0 %1312
        %1314 = vrot.lane.b32.xlu0 %v1180, 32
        %v1315 = vpop.permute.xlu0 %1314
        %1320 = vrot.lane.b32.xlu0 %v1277, 48
        %v1321 = vpop.permute.xlu0 %1320
        %1322 = vrot.lane.b32.xlu0 %v1300, 48
        %v1323 = vpop.permute.xlu0 %1322
        %v1326 = vsel %vm794, %v899, %v1305
        %v1327 = vsel %vm794, %v926, %v1307
        %vm1328 = vcmask 261120
        %v1329 = vsel %vm1328, %v1326, %v1313
        %v1330 = vsel %vm1328, %v1327, %v1315
        %vm1331 = vcmask 392192
        %v1332 = vsel %vm1331, %v1329, %v1321
        %v1333 = vsel %vm1331, %v1330, %v1323
        %v1334 = vld [vmem:[%s607] sm:$0xff]
        %v1335 = vld [vmem:[%s607 + $0x8] sm:$0xff]
        %v1336 = vld [vmem:[%s607 + $0x10] sm:$0xff]
        %v1337 = vld [vmem:[%s607 + $0x18] sm:$0xff]
        %v1338 = vld [vmem:[%s607 + $0x20] sm:$0xff]
        %v1339 = vld [vmem:[%s607 + $0x28] sm:$0xff]
        %v1340 = vld [vmem:[%s607 + $0x30] sm:$0xff]
        %v1341 = vld [vmem:[%s607 + $0x38] sm:$0xff]
        %v1343 = vsel %vm638, %v1332, 0
        %v1346 = vsel %vm638, %v1333, 0
        %1348 = vmatpush.msra.mxu0 0.0
        %1349 = vmatpush.msra.mxu0 0.0
        %1350 = vmatpush.msra.mxu0 0.0
        %1351 = vmatpush.msra.mxu0 0.0
        %1352 = vmatpush.msra.mxu0 0.0
        %1353 = vmatpush.msra.mxu0 0.0
        %1354 = vmatpush.msra.mxu0 0.0
        %1355 = vmatpush.msra.mxu0 0.0
        %1356 = vmatpush.msra.mxu0 %v1341
        %1357 = vmatpush.msra.mxu0 %v1340
        %1358 = vmatpush.msra.mxu0 %v1339
        %1359 = vmatpush.msra.mxu0 %v1338
        %1360 = vmatpush.msra.mxu0 %v1337
        %1361 = vmatpush.msra.mxu0 %v1336
        %1362 = vmatpush.msra.mxu0 %v1335
        %1363 = vmatpush.msra.mxu0 %v1334
        %1364 = vmatmul.f32.gmra.mxu0 %v1343
        %v1365 = vpop.f32.mrf.mxu0
        %v1366 = vadd.f32 0.0, %v1365
        %1367 = vmatmul.f32.gmra.mxu0 %v1346
        %v1368 = vpop.f32.mrf.mxu0
        %v1369 = vadd.f32 0.0, %v1368
        %1370 = vdwg.mxu0
        %v1371 = vadd.f32 %v627, %v1366
        %v1372 = vadd.f32 %v628, %v1369
        %v1373 = vld [vmem:[%s610] sm:$0x1]
        %v1374 = vmul.f32 %v1371, %v1371
        %v1375 = vmul.f32 %v1372, %v1372
        %v1376 = vsel %vm638, %v1374, 0.0
        %1377 = vadd.xlane.f32.xlu0 %v1376
        %v1378 = vpop.xlane.xlu0 %1377
        %v1379 = vsel %vm638, %v1375, 0.0
        %1380 = vadd.xlane.f32.xlu0 %v1379
        %v1381 = vpop.xlane.xlu0 %1380
        %v1382 = vmul.f32 %v1378, %v651
        %v1383 = vmul.f32 %v1381, %v651
        %v1384 = vadd.f32 %v1382, 1e-06
        %v1385 = vadd.f32 %v1383, 1e-06
        %v1386 = vrsqrt.pop %v1384
        %v1387 = vmul.f32 %v1386, %v1384
        %v1388 = vmul.f32 %v1387, %v1386
        %v1389 = vmul.f32 0.5, %v1388
        %v1390 = vsub.f32 1.5, %v1389
        %v1391 = vmul.f32 %v1386, %v1390
        %vm1392 = vweird.f32 %v1384
        %vm1393 = vweird.f32 %v1386
        %vm1394 = vmor %vm1392, %vm1393
        %v1395 = vsel %vm1394, %v1386, %v1391
        %v1396 = vrsqrt.pop %v1385
        %v1397 = vmul.f32 %v1396, %v1385
        %v1398 = vmul.f32 %v1397, %v1396
        %v1399 = vmul.f32 0.5, %v1398
        %v1400 = vsub.f32 1.5, %v1399
        %v1401 = vmul.f32 %v1396, %v1400
        %vm1402 = vweird.f32 %v1385
        %vm1403 = vweird.f32 %v1396
        %vm1404 = vmor %vm1402, %vm1403
        %v1405 = vsel %vm1404, %v1396, %v1401
        %v1406 = vmul.f32 %v1371, %v1395
        %v1407 = vmul.f32 %v1372, %v1405
        %v1408 = vadd.f32 %v1373, 1.0
        %v1410 = vperm.slane %v1408, 0
        %v1412 = vmul.f32 %v1406, %v1410
        %v1413 = vmul.f32 %v1407, %v1410
        %v1414 = vld [vmem:[%s530] sm:$0xff]
        %v1415 = vld [vmem:[%s530 + $0x8] sm:$0xff]
        %v1416 = vld [vmem:[%s530 + $0x10] sm:$0xff]
        %v1417 = vld [vmem:[%s530 + $0x18] sm:$0xff]
        %v1418 = vld [vmem:[%s530 + $0x20] sm:$0xff]
        %v1419 = vld [vmem:[%s530 + $0x28] sm:$0xff]
        %v1420 = vld [vmem:[%s530 + $0x30] sm:$0xff]
        %v1421 = vld [vmem:[%s530 + $0x38] sm:$0xff]
        %v1422 = vld [vmem:[%s530 + $0x40] sm:$0xff]
        %v1423 = vld [vmem:[%s530 + $0x48] sm:$0xff]
        %v1424 = vld [vmem:[%s530 + $0x50] sm:$0xff]
        %v1425 = vld [vmem:[%s530 + $0x58] sm:$0xff]
        %v1426 = vld [vmem:[%s530 + $0x60] sm:$0xff]
        %v1427 = vld [vmem:[%s530 + $0x68] sm:$0xff]
        %v1428 = vld [vmem:[%s530 + $0x70] sm:$0xff]
        %v1429 = vld [vmem:[%s530 + $0x78] sm:$0xff]
        %v1431 = vsel %vm638, %v1412, 0
        %v1434 = vsel %vm638, %v1413, 0
        %1436 = vmatpush.msra.mxu0 0.0
        %1437 = vmatpush.msra.mxu0 0.0
        %1438 = vmatpush.msra.mxu0 0.0
        %1439 = vmatpush.msra.mxu0 0.0
        %1440 = vmatpush.msra.mxu0 0.0
        %1441 = vmatpush.msra.mxu0 0.0
        %1442 = vmatpush.msra.mxu0 0.0
        %1443 = vmatpush.msra.mxu0 0.0
        %1444 = vmatpush.msra.mxu0 %v1428
        %1445 = vmatpush.msra.mxu0 %v1426
        %1446 = vmatpush.msra.mxu0 %v1424
        %1447 = vmatpush.msra.mxu0 %v1422
        %1448 = vmatpush.msra.mxu0 %v1420
        %1449 = vmatpush.msra.mxu0 %v1418
        %1450 = vmatpush.msra.mxu0 %v1416
        %1451 = vmatpush.msra.mxu0 %v1414
        %1452 = vmatmul.f32.gmra.mxu0 %v1431
        %v1453 = vpop.f32.mrf.mxu0
        %v1454 = vadd.f32 0.0, %v1453
        %1455 = vmatmul.f32.gmra.mxu0 %v1434
        %v1456 = vpop.f32.mrf.mxu0
        %v1457 = vadd.f32 0.0, %v1456
        %1458 = vdwg.mxu0
        %1459 = vmatpush.msra.mxu0 0.0
        %1460 = vmatpush.msra.mxu0 0.0
        %1461 = vmatpush.msra.mxu0 0.0
        %1462 = vmatpush.msra.mxu0 0.0
        %1463 = vmatpush.msra.mxu0 0.0
        %1464 = vmatpush.msra.mxu0 0.0
        %1465 = vmatpush.msra.mxu0 0.0
        %1466 = vmatpush.msra.mxu0 0.0
        %1467 = vmatpush.msra.mxu0 %v1429
        %1468 = vmatpush.msra.mxu0 %v1427
        %1469 = vmatpush.msra.mxu0 %v1425
        %1470 = vmatpush.msra.mxu0 %v1423
        %1471 = vmatpush.msra.mxu0 %v1421
        %1472 = vmatpush.msra.mxu0 %v1419
        %1473 = vmatpush.msra.mxu0 %v1417
        %1474 = vmatpush.msra.mxu0 %v1415
        %1475 = vmatmul.f32.gmra.mxu0 %v1431
        %v1476 = vpop.f32.mrf.mxu0
        %v1477 = vadd.f32 0.0, %v1476
        %1478 = vmatmul.f32.gmra.mxu0 %v1434
        %v1479 = vpop.f32.mrf.mxu0
        %v1480 = vadd.f32 0.0, %v1479
        %1481 = vdwg.mxu0
        %v1482 = vmul.f32 %v1454, 0.5
        %v1483 = vmul.f32 %v1457, 0.5
        %v1484 = vmul.f32 %v1454, 0.044715
        %v1485 = vmul.f32 %v1457, 0.044715
        %v1486 = vmul.f32 %v1484, %v1454
        %v1487 = vmul.f32 %v1485, %v1457
        %v1488 = vmul.f32 %v1486, %v1454
        %v1489 = vmul.f32 %v1487, %v1457
        %v1490 = vadd.f32 %v1454, %v1488
        %v1491 = vadd.f32 %v1457, %v1489
        %v1492 = vmul.f32 %v1490, 0.7978846
        %v1493 = vmul.f32 %v1491, 0.7978846
        %v1494 = vtanh.pop %v1492
        %v1495 = vtanh.pop %v1493
        %v1496 = vadd.f32 %v1494, 1.0
        %v1497 = vadd.f32 %v1495, 1.0
        %v1498 = vmul.f32 %v1482, %v1496
        %v1499 = vmul.f32 %v1483, %v1497
        %v1500 = vmul.f32 %v1498, %v1477
        %v1501 = vmul.f32 %v1499, %v1480
        %v1502 = vld [vmem:[%s615] sm:$0xff]
        %v1503 = vld [vmem:[%s615 + $0x8] sm:$0xff]
        %v1504 = vld [vmem:[%s615 + $0x10] sm:$0xff]
        %v1505 = vld [vmem:[%s615 + $0x18] sm:$0xff]
        %v1506 = vld [vmem:[%s615 + $0x20] sm:$0xff]
        %v1507 = vld [vmem:[%s615 + $0x28] sm:$0xff]
        %v1508 = vld [vmem:[%s615 + $0x30] sm:$0xff]
        %v1509 = vld [vmem:[%s615 + $0x38] sm:$0xff]
        %v1510 = vld [vmem:[%s615 + $0x40] sm:$0xff]
        %v1511 = vld [vmem:[%s615 + $0x48] sm:$0xff]
        %v1512 = vld [vmem:[%s615 + $0x50] sm:$0xff]
        %v1513 = vld [vmem:[%s615 + $0x58] sm:$0xff]
        %v1514 = vld [vmem:[%s615 + $0x60] sm:$0xff]
        %v1515 = vld [vmem:[%s615 + $0x68] sm:$0xff]
        %v1516 = vld [vmem:[%s615 + $0x70] sm:$0xff]
        %v1517 = vld [vmem:[%s615 + $0x78] sm:$0xff]
        %1518 = vmatpush.msra.mxu0 %v1517
        %1519 = vmatpush.msra.mxu0 %v1516
        %1520 = vmatpush.msra.mxu0 %v1515
        %1521 = vmatpush.msra.mxu0 %v1514
        %1522 = vmatpush.msra.mxu0 %v1513
        %1523 = vmatpush.msra.mxu0 %v1512
        %1524 = vmatpush.msra.mxu0 %v1511
        %1525 = vmatpush.msra.mxu0 %v1510
        %1526 = vmatpush.msra.mxu0 %v1509
        %1527 = vmatpush.msra.mxu0 %v1508
        %1528 = vmatpush.msra.mxu0 %v1507
        %1529 = vmatpush.msra.mxu0 %v1506
        %1530 = vmatpush.msra.mxu0 %v1505
        %1531 = vmatpush.msra.mxu0 %v1504
        %1532 = vmatpush.msra.mxu0 %v1503
        %1533 = vmatpush.msra.mxu0 %v1502
        %1534 = vmatmul.f32.gmra.mxu0 %v1500
        %v1535 = vpop.f32.mrf.mxu0
        %v1536 = vadd.f32 0.0, %v1535
        %1537 = vmatmul.f32.gmra.mxu0 %v1501
        %v1538 = vpop.f32.mrf.mxu0
        %v1539 = vadd.f32 0.0, %v1538
        %1540 = vdwg.mxu0
        %v1541 = vadd.f32 %v1371, %v1536
        %v1542 = vadd.f32 %v1372, %v1539
        %1543 = vst.msk [vmem:[#allocation2] sm:$0xff] %vm638, %v1541
        %1544 = vst.msk [vmem:[#allocation2 + $0x8] sm:$0xff] %vm638, %v1542
        %p1545 = scmp.eq.s32.totalorder %s30, 1
        // Predicated region
        $region97: #{tpu_custom_call.1} parent=67 // pred_check
          %p1546 = pneg %p1545
        $region98: #{tpu_custom_call.1} parent=67 // pred_check_branch
          %1548 = sbr.rel (%p1546) target = $region100
        $region99: #{tpu_custom_call.1} parent=67 // pred_region
          %v1549 = vld [vmem:[%s10] sm:$0x1]
          %v1550 = vmul.f32 %v1541, %v1541
          %v1551 = vmul.f32 %v1542, %v1542
          %v1552 = vsel %vm638, %v1550, 0.0
          %1553 = vadd.xlane.f32.xlu0 %v1552
          %v1554 = vpop.xlane.xlu0 %1553
          %v1555 = vsel %vm638, %v1551, 0.0
          %1556 = vadd.xlane.f32.xlu0 %v1555
          %v1557 = vpop.xlane.xlu0 %1556
          %v1558 = vmul.f32 %v1554, %v651
          %v1559 = vmul.f32 %v1557, %v651
          %v1560 = vadd.f32 %v1558, 1e-06
          %v1561 = vadd.f32 %v1559, 1e-06
          %v1562 = vrsqrt.pop %v1560
          %v1563 = vmul.f32 %v1562, %v1560
          %v1564 = vmul.f32 %v1563, %v1562
          %v1565 = vmul.f32 0.5, %v1564
          %v1566 = vsub.f32 1.5, %v1565
          %v1567 = vmul.f32 %v1562, %v1566
          %vm1568 = vweird.f32 %v1560
          %vm1569 = vweird.f32 %v1562
          %vm1570 = vmor %vm1568, %vm1569
          %v1571 = vsel %vm1570, %v1562, %v1567
          %v1572 = vrsqrt.pop %v1561
          %v1573 = vmul.f32 %v1572, %v1561
          %v1574 = vmul.f32 %v1573, %v1572
          %v1575 = vmul.f32 0.5, %v1574
          %v1576 = vsub.f32 1.5, %v1575
          %v1577 = vmul.f32 %v1572, %v1576
          %vm1578 = vweird.f32 %v1561
          %vm1579 = vweird.f32 %v1572
          %vm1580 = vmor %vm1578, %vm1579
          %v1581 = vsel %vm1580, %v1572, %v1577
          %v1582 = vmul.f32 %v1541, %v1571
          %v1583 = vmul.f32 %v1542, %v1581
          %v1584 = vadd.f32 %v1549, 1.0
          %v1586 = vperm.slane %v1584, 0
          %v1588 = vmul.f32 %v1582, %v1586
          %v1589 = vmul.f32 %v1583, %v1586
          %1590 = vst.msk [vmem:[#allocation13] sm:$0xff] %vm638, %v1588
          %1591 = vst.msk [vmem:[#allocation13 + $0x8] sm:$0xff] %vm638, %v1589
          %v1592 = vld [vmem:[#allocation12] sm:$0xff]
          %v1593 = vld [vmem:[#allocation12 + $0x8] sm:$0xff]
          %v1594 = vld [vmem:[#allocation12 + $0x10] sm:$0xff]
          %v1595 = vld [vmem:[#allocation12 + $0x18] sm:$0xff]
          %v1596 = vld [vmem:[#allocation12 + $0x20] sm:$0xff]
          %v1597 = vld [vmem:[#allocation12 + $0x28] sm:$0xff]
          %v1598 = vld [vmem:[#allocation12 + $0x30] sm:$0xff]
          %v1599 = vld [vmem:[#allocation12 + $0x38] sm:$0xff]
          %v1601 = vsel %vm638, %v1588, 0
          %v1604 = vsel %vm638, %v1589, 0
          %1606 = vmatpush.msra.mxu0 0.0
          %1607 = vmatpush.msra.mxu0 0.0
          %1608 = vmatpush.msra.mxu0 0.0
          %1609 = vmatpush.msra.mxu0 0.0
          %1610 = vmatpush.msra.mxu0 0.0
          %1611 = vmatpush.msra.mxu0 0.0
          %1612 = vmatpush.msra.mxu0 0.0
          %1613 = vmatpush.msra.mxu0 0.0
          %1614 = vmatpush.msra.mxu0 %v1599
          %1615 = vmatpush.msra.mxu0 %v1598
          %1616 = vmatpush.msra.mxu0 %v1597
          %1617 = vmatpush.msra.mxu0 %v1596
          %1618 = vmatpush.msra.mxu0 %v1595
          %1619 = vmatpush.msra.mxu0 %v1594
          %1620 = vmatpush.msra.mxu0 %v1593
          %1621 = vmatpush.msra.mxu0 %v1592
          %1622 = vmatmul.f32.gmra.mxu0 %v1601
          %v1623 = vpop.f32.mrf.mxu0
          %v1624 = vadd.f32 0.0, %v1623
          %1625 = vmatmul.f32.gmra.mxu0 %v1604
          %v1626 = vpop.f32.mrf.mxu0
          %v1627 = vadd.f32 0.0, %v1626
          %1628 = vdwg.mxu0
          %1629 = vst [vmem:[#allocation14] sm:$0xff] %v1624
          %1630 = vst [vmem:[#allocation14 + $0x8] sm:$0xff] %v1627
        $region100: #{tpu_custom_call.1} parent=67 // pred_fallthru
          _
        // Predicated region
        $region101: #{tpu_custom_call.1} parent=67 // pred_check
          %p1631 = pneg %p325
        $region102: #{tpu_custom_call.1} parent=67 // pred_check_branch
          %1633 = sbr.rel (%p1631) target = $region104
        $region103: #{tpu_custom_call.1} parent=67 // pred_region
          %1635 = vsyncadd [#allocation5], 0
          %s1636 = sshll.u32 [#allocation13], 4
          %s1637 = int_to_ptr.vmem [resolvable:$true] %s1636
          %s1638 = sshll.u32 %s12, 4
          %s1639 = int_to_ptr.hbm [resolvable:$true] %s1638
          %1644 = dma.vmem_to_hbm [thread:$0]  %s1637, 256, %s1639, [#allocation5], 128, 128, 8
        $region104: #{tpu_custom_call.1} parent=67 // pred_fallthru
          _
        // Predicated region
        $region105: #{tpu_custom_call.1} parent=67 // pred_check
          %p1645 = pneg %p346
        $region106: #{tpu_custom_call.1} parent=67 // pred_check_branch
          %1647 = sbr.rel (%p1645) target = $region108
        $region107: #{tpu_custom_call.1} parent=67 // pred_region
          %1649 = vsyncadd [#allocation15], 0
          %s1650 = sshll.u32 [#allocation14], 4
          %s1651 = int_to_ptr.vmem [resolvable:$true] %s1650
          %s1652 = sshll.u32 %s13, 4
          %s1653 = int_to_ptr.hbm [resolvable:$true] %s1652
          %1658 = dma.vmem_to_hbm [thread:$0]  %s1651, 256, %s1653, [#allocation15], 128, 128, 8
        $region108: #{tpu_custom_call.1} parent=67 // pred_fallthru
          _
        // Predicated region
        $region109: #{tpu_custom_call.1} parent=67 // pred_check
          %p1659 = pneg %p325
        $region110: #{tpu_custom_call.1} parent=67 // pred_check_branch
          %1661 = sbr.rel (%p1659) target = $region112
        $region111: #{tpu_custom_call.1} parent=67 // pred_region
          %1663 = dma.done [#allocation5], 256
        $region112: #{tpu_custom_call.1} parent=67 // pred_fallthru
          _
        // Predicated region
        $region113: #{tpu_custom_call.1} parent=67 // pred_check
          %p1664 = pneg %p346
        $region114: #{tpu_custom_call.1} parent=67 // pred_check_branch
          %1666 = sbr.rel (%p1664) target = $region116
        $region115: #{tpu_custom_call.1} parent=67 // pred_region
          %1668 = dma.done [#allocation15], 256
        $region116: #{tpu_custom_call.1} parent=67 // pred_fallthru
          _
      $region68: #{tpu_custom_call.1} parent=5 // pred_fallthru
        _
      %p1669 = scmp.le.s32.totalorder 2, %s25
      // Predicated region
      $region117: #{tpu_custom_call.1} parent=5 // pred_check
        %p1670 = pneg %p1669
      $region118: #{tpu_custom_call.1} parent=5 // pred_check_branch
        %1672 = sbr.rel (%p1670) target = $region120
      $region119: #{tpu_custom_call.1} parent=5 // pred_region
        %s1673 = ssub.s32 %s25, 2
      $region120: #{tpu_custom_call.1} parent=5 // pred_fallthru
        _
    $region6: #{tpu_custom_call.1} parent=1 // loop_footer
      %s29 = sadd.s32 1, %s25
    $region7: #{tpu_custom_call.1} parent=1 // loop_footer_branch
      %24 = sbr.rel target = $region3
    $region8: #{tpu_custom_call.1} parent=1 // loop_exit
      _
    %1674 = vsyncpa [#allocation4], 1
    %s1675 = scalar_lea.sflag [#allocation4], 1
    %1676 = vsyncpa %s1675, 1
    %1677 = vsyncpa [#allocation7], 1
    %1678 = vsyncpa [#allocation10], 1
    %1679 = vsyncpa [#allocation5], 1
    %s1680 = scalar_lea.sflag [#allocation5], 1
    %1681 = vsyncpa %s1680, 1
    %1682 = vsyncpa [#allocation15], 1

</llo_original>
